<compile_context>
chip_gen: v7x
topology: tpu7x:2x2x1
jax: 0.10.0
libtpu: 0.0.40
codegen_flags: <defaults>
</compile_context>

<pallas_src>
import jax
import jax.numpy as jnp
from jax.experimental import pallas as pl
from jax.experimental.pallas import tpu as pltpu

BN_EPS = 1e-5
USE_TANH_GELU = True   # tanh GELU -> EUP slot (VALU free). False = exact erf (bit-faithful).


def _round_up(n, m):
    return ((n + m - 1) // m) * m


def _gelu(h):
    if USE_TANH_GELU:
        c = 0.7978845608028654  # sqrt(2/pi)
        return 0.5 * h * (1.0 + jnp.tanh(c * (h + 0.044715 * h * h * h)))
    return 0.5 * h * (1.0 + jax.lax.erf(h * 0.7071067811865476))


def _vmem_capacity_bytes():
    """Physical VMEM of the local TensorCore; conservative 64 MiB (v7x) fallback."""
    try:
        info = pltpu.get_tpu_info()
        for name in ("vmem_capacity_bytes", "vmem_size_bytes", "vmem_bytes"):
            v = getattr(info, name, None)
            if v:
                return int(v)
    except Exception:
        pass
    return 64 * 1024 * 1024


def _pick_spatial_tile(hw, c, c_out, hp, op, x_item, budget):
    """Largest lane-dense token tile whose pass-2 working set fits the VMEM budget.
    Prefers a tile that divides H*W exactly (no padding / masking needed)."""
    def working_set(tw):
        weights = 2 * (hp * c + op * hp) * 2              # double-buffered bf16 weights
        x_buf = 2 * c * tw * x_item                       # x tile, double-buffered
        y_buf = 2 * c_out * tw * 2                        # bf16 y tile, double-buffered
        inter = hp * tw * 4 + hp * tw * 2 + op * tw * 4   # z(f32) + g(bf16) + y(f32)
        return weights + x_buf + y_buf + inter + (2 << 20)

    menu = (2048, 1024, 512, 256, 128)
    fits = [t for t in menu if working_set(t) <= budget]
    if not fits:
        fits = [128]   # TODO(synk): hidden-dim tiling for very large hidden/channels
    divisors = [t for t in fits if hw % t == 0]
    return divisors[0] if divisors else fits[0]


# --------------------------------- kernels ---------------------------------------------

def _xgram_kernel(x_ref, sx_ref, g_ref):
    """Pass 1 (Gram form): per-batch resident accumulation of sum(x) and x @ x^T."""
    xf = x_ref[...].astype(jnp.float32)
    xb = x_ref[...].astype(jnp.bfloat16)
    s = jnp.sum(xf, axis=1, keepdims=True)                                  # (C, 1)
    gm = jax.lax.dot_general(xb, xb, (((1,), (1,)), ((), ())),
                             preferred_element_type=jnp.float32)            # (C, C)

    @pl.when(pl.program_id(1) == 0)
    def _():
        sx_ref[...] = jnp.zeros_like(sx_ref)
        g_ref[...] = jnp.zeros_like(g_ref)

    sx_ref[...] += s
    g_ref[...] += gm


def _zstats_kernel(x_ref, w1_ref, st_ref):
    """Pass 1 (direct form, used when C > hidden or C tiny): per-batch sum/sumsq of z."""
    xb = x_ref[...].astype(jnp.bfloat16)
    z = jnp.dot(w1_ref[...], xb, preferred_element_type=jnp.float32)        # (HP, TW)

    @pl.when(pl.program_id(1) == 0)
    def _():
        st_ref[...] = jnp.zeros_like(st_ref)

    st_ref[:, 0:1] += jnp.sum(z, axis=1, keepdims=True)
    st_ref[:, 1:2] += jnp.sum(z * z, axis=1, keepdims=True)


def _make_mid_kernel(c_out, tw, hw):
    """Pass 2: fc1 -> folded BN1 -> GELU -> fc2; bf16 y tile + per-tile BN2 partials."""
    need_mask = (hw % tw) != 0

    def kernel(x_ref, w1_ref, w2_ref, sc1_ref, sh1_ref, y_ref, st_ref):
        xb = x_ref[...].astype(jnp.bfloat16)
        z = jnp.dot(w1_ref[...], xb, preferred_element_type=jnp.float32)    # (HP, TW)
        h = sc1_ref[...] * z + sh1_ref[...]                                 # folded BN1
        g = _gelu(h)
        yz = jnp.dot(w2_ref[...], g.astype(jnp.bfloat16),
                     preferred_element_type=jnp.float32)                    # (OP, TW)
        y_ref[...] = yz[:c_out, :].astype(y_ref.dtype)                      # bf16 y tile

        if need_mask:
            # Zero-padded tokens still yield y = W2 gelu(sh1) != 0; keep them out of the
            # BN2 statistics.
            valid = hw - pl.program_id(1) * tw
            col = jax.lax.broadcasted_iota(jnp.int32, (1, tw), 1)
            m = (col < valid).astype(jnp.float32)
            ym = yz * m
            st_ref[:, 0:1] = jnp.sum(ym, axis=1, keepdims=True)
            st_ref[:, 1:2] = jnp.sum(ym * yz, axis=1, keepdims=True)
        else:
            st_ref[:, 0:1] = jnp.sum(yz, axis=1, keepdims=True)
            st_ref[:, 1:2] = jnp.sum(yz * yz, axis=1, keepdims=True)

    return kernel


def _bn2_kernel(y_ref, sc2_ref, sh2_ref, o_ref):
    """Pass 3: folded BN2 affine, lane-dense NCHW store."""
    yf = y_ref[...].astype(jnp.float32)
    o_ref[...] = (sc2_ref[...] * yf + sh2_ref[...]).astype(o_ref.dtype)


# --------------------------------- wrapper ----------------------------------------------

def mlp_forward(x_nchw, params):
    """x_nchw: [B, C, H, W] -> [B, C_out, H, W] (training-mode BatchNorm semantics)."""
    w1, b1, g1, be1, w2, b2, g2, be2 = params   # PyTorch layouts: w1 (hid, C), w2 (C_out, hid)
    del b1, b2   # conv biases cancel exactly under batch-statistics BatchNorm

    B, C, H, W = x_nchw.shape
    hidden = int(w1.shape[0])
    c_out = int(w2.shape[0])
    HW = H * W
    Nf = jnp.float32(B * HW)                    # true sample count (padding excluded)

    HP = _round_up(hidden, 128)
    OP = _round_up(c_out, 128)

    x_item = jnp.dtype(x_nchw.dtype).itemsize
    vmem_cap = _vmem_capacity_bytes()
    vmem_limit = min(vmem_cap, max(32 << 20, (vmem_cap * 3) // 4))
    TW = _pick_spatial_tile(HW, C, c_out, HP, OP, x_item, (vmem_limit * 7) // 10)
    HW_pad = _round_up(HW, TW)
    n_t = HW_pad // TW

    x3 = x_nchw.reshape(B, C, HW)               # free reshape: channels->sublanes, tokens->lanes
    if HW_pad != HW:
        x3 = jnp.pad(x3, ((0, 0), (0, 0), (0, HW_pad - HW)))

    w1p = jnp.pad(w1, ((0, HP - hidden), (0, 0))).astype(jnp.bfloat16)            # (HP, C)
    w2p = jnp.pad(w2, ((0, OP - c_out), (0, HP - hidden))).astype(jnp.bfloat16)   # (OP, HP)

    grid = (B, n_t)
    x_spec = pl.BlockSpec((None, C, TW), lambda b, t: (b, 0, t))
    w1_spec = pl.BlockSpec((HP, C), lambda b, t: (0, 0))        # VMEM-resident weights
    w2_spec = pl.BlockSpec((OP, HP), lambda b, t: (0, 0))

    cp_p1 = pltpu.CompilerParams(dimension_semantics=("parallel", "arbitrary"),
                                 vmem_limit_bytes=vmem_limit)
    cp_par = pltpu.CompilerParams(dimension_semantics=("parallel", "parallel"),
                                  vmem_limit_bytes=vmem_limit)

    # ------------------------- pass 1: BN1 batch statistics -------------------------
    use_gram = (hidden >= C) and (C >= 8)       # Gram form saves MXU work when hidden >= C
    if use_gram:
        sx_p, g_p = pl.pallas_call(
            _xgram_kernel,
            grid=grid,
            in_specs=[x_spec],
            out_specs=(pl.BlockSpec((None, C, 1), lambda b, t: (b, 0, 0)),
                       pl.BlockSpec((None, C, C), lambda b, t: (b, 0, 0))),
            out_shape=(jax.ShapeDtypeStruct((B, C, 1), jnp.float32),
                       jax.ShapeDtypeStruct((B, C, C), jnp.float32)),
            compiler_params=cp_p1,
            cost_estimate=pl.CostEstimate(
                flops=2 * B * HW_pad * C * C, transcendentals=0,
                bytes_accessed=B * C * HW_pad * x_item + 4 * B * C * (C + 1)),
        )(x3)
        mu_x = jnp.sum(sx_p[:, :, 0], axis=0) / Nf                      # (C,)
        exx = jnp.sum(g_p, axis=0) / Nf                                 # (C, C)
        cov_x = exx - jnp.outer(mu_x, mu_x)
        w1f = w1.astype(jnp.float32)
        mu1 = w1f @ mu_x                                                # (hidden,)
        var1 = jnp.maximum(jnp.einsum("hc,cd,hd->h", w1f, cov_x, w1f), 0.0)
    else:
        zst = pl.pallas_call(
            _zstats_kernel,
            grid=grid,
            in_specs=[x_spec, w1_spec],
            out_specs=pl.BlockSpec((None, HP, 2), lambda b, t: (b, 0, 0)),
            out_shape=jax.ShapeDtypeStruct((B, HP, 2), jnp.float32),
            compiler_params=cp_p1,
            cost_estimate=pl.CostEstimate(
                flops=2 * B * HW_pad * C * HP, transcendentals=0,
                bytes_accessed=B * C * HW_pad * x_item + 2 * HP * C + 8 * B * HP),
        )(x3, w1p)
        tot1 = jnp.sum(zst, axis=0)                                     # (HP, 2)
        mu1 = tot1[:hidden, 0] / Nf
        var1 = jnp.maximum(tot1[:hidden, 1] / Nf - mu1 * mu1, 0.0)

    sc1v = g1.astype(jnp.float32) * jax.lax.rsqrt(var1 + BN_EPS)
    sh1v = be1.astype(jnp.float32) - sc1v * mu1
    sc1 = jnp.pad(sc1v, (0, HP - hidden)).reshape(HP, 1)
    sh1 = jnp.pad(sh1v, (0, HP - hidden)).reshape(HP, 1)

    # ----- pass 2: BN1 + GELU + fc2, bf16 y tiles, per-tile BN2 partial statistics -----
    y_mid, st2 = pl.pallas_call(
        _make_mid_kernel(c_out, TW, HW),
        grid=grid,
        in_specs=[x_spec, w1_spec, w2_spec,
                  pl.BlockSpec((HP, 1), lambda b, t: (0, 0)),
                  pl.BlockSpec((HP, 1), lambda b, t: (0, 0))],
        out_specs=(pl.BlockSpec((None, c_out, TW), lambda b, t: (b, 0, t)),
                   pl.BlockSpec((None, None, OP, 2), lambda b, t: (b, t, 0, 0))),
        out_shape=(jax.ShapeDtypeStruct((B, c_out, HW_pad), jnp.bfloat16),
                   jax.ShapeDtypeStruct((B, n_t, OP, 2), jnp.float32)),
        compiler_params=cp_par,
        cost_estimate=pl.CostEstimate(
            flops=2 * B * HW_pad * (C * HP + HP * OP),
            transcendentals=B * HW_pad * HP,
            bytes_accessed=(B * C * HW_pad * x_item + 2 * B * c_out * HW_pad
                            + 2 * (HP * C + OP * HP) + 8 * B * n_t * OP + 8 * HP)),
    )(x3, w1p, w2p, sc1, sh1)

    tot2 = jnp.sum(st2, axis=(0, 1))                                    # (OP, 2)
    mu2 = tot2[:c_out, 0] / Nf
    var2 = jnp.maximum(tot2[:c_out, 1] / Nf - mu2 * mu2, 0.0)
    sc2v = g2.astype(jnp.float32) * jax.lax.rsqrt(var2 + BN_EPS)
    sh2v = be2.astype(jnp.float32) - sc2v * mu2
    sc2 = sc2v.reshape(c_out, 1)
    sh2 = sh2v.reshape(c_out, 1)

    # ------------------- pass 3: folded BN2 affine, lane-dense NCHW output -------------------
    out3 = pl.pallas_call(
        _bn2_kernel,
        grid=grid,
        in_specs=[pl.BlockSpec((None, c_out, TW), lambda b, t: (b, 0, t)),
                  pl.BlockSpec((c_out, 1), lambda b, t: (0, 0)),
                  pl.BlockSpec((c_out, 1), lambda b, t: (0, 0))],
        out_specs=pl.BlockSpec((None, c_out, TW), lambda b, t: (b, 0, t)),
        out_shape=jax.ShapeDtypeStruct((B, c_out, HW_pad), x_nchw.dtype),
        compiler_params=cp_par,
        cost_estimate=pl.CostEstimate(
            flops=2 * B * c_out * HW_pad, transcendentals=0,
            bytes_accessed=B * c_out * HW_pad * (2 + x_item) + 8 * c_out),
    )(y_mid, sc2, sh2)

    return out3[:, :, :HW].reshape(B, c_out, H, W)


# --------------------------------- init & reference -------------------------------------

def init_params(key, in_features, hidden_features, out_features):
    """Mirrors the PyTorch init: conv weight ~ trunc_normal(std=0.02) (approximated with
    normal*0.02), conv bias = 0, BN gamma = 1, beta = 0. PyTorch Conv2d weight layouts."""
    k1, k2 = jax.random.split(key)
    w1 = jax.random.normal(k1, (hidden_features, in_features), jnp.float32) * 0.02
    b1 = jnp.zeros((hidden_features,), jnp.float32)
    g1 = jnp.ones((hidden_features,), jnp.float32)
    be1 = jnp.zeros((hidden_features,), jnp.float32)
    w2 = jax.random.normal(k2, (out_features, hidden_features), jnp.float32) * 0.02
    b2 = jnp.zeros((out_features,), jnp.float32)
    g2 = jnp.ones((out_features,), jnp.float32)
    be2 = jnp.zeros((out_features,), jnp.float32)
    return (w1, b1, g1, be1, w2, b2, g2, be2)


def mlp_reference(x, params):
    """Pure-jnp f32 reference (exact-erf GELU, training-mode BN) for a loose check."""
    w1, b1, g1, be1, w2, b2, g2, be2 = params
    B, C, H, W = x.shape
    xt = x.reshape(B, C, H * W).astype(jnp.float32)

    def bn(z, gamma, beta):
        mu = z.mean(axis=(0, 2), keepdims=True)
        var = z.var(axis=(0, 2), keepdims=True)
        return (z - mu) * jax.lax.rsqrt(var + BN_EPS) * gamma[None, :, None] + beta[None, :, None]

    z = jnp.einsum("hc,bct->bht", w1, xt) + b1[None, :, None]
    h = bn(z, g1, be1)
    g = 0.5 * h * (1.0 + jax.lax.erf(h * 0.7071067811865476))
    y = jnp.einsum("oh,bht->bot", w2, g) + b2[None, :, None]
    o = bn(y, g2, be2)
    return o.reshape(B, w2.shape[0], H, W)


if __name__ == "__main__":
    B, C, H, W = 2, 4, 16, 16
    hidden = 32
    out_c = C   # out_features defaults to in_features

    key = jax.random.PRNGKey(0)
    kx, kp = jax.random.split(key)
    x = jax.random.normal(kx, (B, C, H, W), jnp.float32)
    params = init_params(kp, C, hidden, out_c)

    y = jax.jit(mlp_forward)(x, params)
    jax.block_until_ready(y)
    assert y.shape == (B, out_c, H, W), y.shape
    assert bool(jnp.all(jnp.isfinite(y))), "non-finite output"

    # Loose numerical check vs an f32 reference (bf16 MXU + tanh-GELU tolerance).
    y_ref = mlp_reference(x, params)
    assert bool(jnp.allclose(y, y_ref, rtol=0.05, atol=0.05)), (
        f"mismatch vs reference: max abs err = {float(jnp.max(jnp.abs(y - y_ref)))}")

    print("KERNEL_OK")
</pallas_src>

<mosaic_0001>
module attributes {stable_mosaic.version = 11 : i64} {
  func.func @_zstats_kernel(%arg0: i32, %arg1: i32, %arg2: memref<1x4x256xf32, #tpu.memory_space<vmem>>, %arg3: memref<128x4xbf16, #tpu.memory_space<vmem>>, %arg4: memref<1x128x2xf32, #tpu.memory_space<vmem>>) attributes {dimension_semantics = [#tpu.dimension_semantics<parallel>, #tpu.dimension_semantics<arbitrary>], iteration_bounds = array<i64: 2, 1>, scalar_prefetch = 0 : i64, scratch_operands = 0 : i64, tpu.core_type = #tpu.core_type<tc>, window_params = [{transform_indices = @transform_0, window_bounds = array<i64: 1, 4, 256>}, {pipeline_mode = #tpu.pipeline_mode<synchronous>, transform_indices = @transform_1, window_bounds = array<i64: 128, 4>}, {transform_indices = @transform_2, window_bounds = array<i64: 1, 128, 2>}]} {
    %c0 = arith.constant 0 : index
    %c0_0 = arith.constant 0 : index
    %c0_1 = arith.constant 0 : index
    %0 = vector.load %arg2[%c0, %c0_0, %c0_1] : memref<1x4x256xf32, #tpu.memory_space<vmem>>, vector<1x4x256xf32>
    %1 = vector.shape_cast %0 : vector<1x4x256xf32> to vector<4x256xf32>
    %2 = arith.truncf %1 : vector<4x256xf32> to vector<4x256xbf16>
    %c0_2 = arith.constant 0 : index
    %c0_3 = arith.constant 0 : index
    %3 = vector.load %arg3[%c0_2, %c0_3] : memref<128x4xbf16, #tpu.memory_space<vmem>>, vector<128x4xbf16>
    %cst = arith.constant dense<0.000000e+00> : vector<128x256xf32>
    %4 = tpu.matmul %3, %2, %cst {dimension_numbers = #tpu.dot_dimension_numbers<[1], [0], [0], [1], [0, 0, 1, 1], [], []>} : vector<128x4xbf16>, vector<4x256xbf16>, vector<128x256xf32> -> vector<128x256xf32>
    %c0_i32 = arith.constant 0 : i32
    %5 = arith.cmpi eq, %arg1, %c0_i32 : i32
    %6 = arith.extui %5 : i1 to i32
    %c0_i32_4 = arith.constant 0 : i32
    %7 = arith.cmpi ne, %6, %c0_i32_4 : i32
    scf.if %7 {
      %cst_18 = arith.constant 0.000000e+00 : f32
      %25 = vector.broadcast %cst_18 : f32 to vector<128x2xf32>
      %c0_19 = arith.constant 0 : index
      %c0_20 = arith.constant 0 : index
      %c0_21 = arith.constant 0 : index
      %26 = vector.load %arg4[%c0_19, %c0_20, %c0_21] : memref<1x128x2xf32, #tpu.memory_space<vmem>>, vector<1x128x2xf32>
      %27 = vector.shape_cast %26 : vector<1x128x2xf32> to vector<128x2xf32>
      %28 = vector.shape_cast %25 : vector<128x2xf32> to vector<1x128x2xf32>
      tpu.vector_store %arg4[%c0_19, %c0_20, %c0_21], %28 {strides = array<i32>} : memref<1x128x2xf32, #tpu.memory_space<vmem>>, vector<1x128x2xf32>,
    } else {
    }
    %c0_5 = arith.constant 0 : index
    %c0_6 = arith.constant 0 : index
    %c0_7 = arith.constant 0 : index
    %8 = vector.load %arg4[%c0_5, %c0_6, %c0_7] : memref<1x128x2xf32, #tpu.memory_space<vmem>>, vector<1x128x1xf32>
    %9 = vector.shape_cast %8 : vector<1x128x1xf32> to vector<128x1xf32>
    %cst_8 = arith.constant dense<0.000000e+00> : vector<128xf32>
    %10 = vector.multi_reduction <add>, %4, %cst_8 [1] : vector<128x256xf32> to vector<128xf32>
    %11 = vector.shape_cast %10 : vector<128xf32> to vector<128x1xf32>
    %12 = arith.addf %9, %11 : vector<128x1xf32>
    %c0_9 = arith.constant 0 : index
    %c0_10 = arith.constant 0 : index
    %c0_11 = arith.constant 0 : index
    %13 = vector.load %arg4[%c0_9, %c0_10, %c0_11] : memref<1x128x2xf32, #tpu.memory_space<vmem>>, vector<1x128x1xf32>
    %14 = vector.shape_cast %13 : vector<1x128x1xf32> to vector<128x1xf32>
    %15 = vector.shape_cast %12 : vector<128x1xf32> to vector<1x128x1xf32>
    tpu.vector_store %arg4[%c0_9, %c0_10, %c0_11], %15 {strides = array<i32>} : memref<1x128x2xf32, #tpu.memory_space<vmem>>, vector<1x128x1xf32>,
    %c0_12 = arith.constant 0 : index
    %c0_13 = arith.constant 0 : index
    %c1 = arith.constant 1 : index
    %16 = vector.load %arg4[%c0_12, %c0_13, %c1] : memref<1x128x2xf32, #tpu.memory_space<vmem>>, vector<1x128x1xf32>
    %17 = vector.shape_cast %16 : vector<1x128x1xf32> to vector<128x1xf32>
    %18 = arith.mulf %4, %4 : vector<128x256xf32>
    %cst_14 = arith.constant dense<0.000000e+00> : vector<128xf32>
    %19 = vector.multi_reduction <add>, %18, %cst_14 [1] : vector<128x256xf32> to vector<128xf32>
    %20 = vector.shape_cast %19 : vector<128xf32> to vector<128x1xf32>
    %21 = arith.addf %17, %20 : vector<128x1xf32>
    %c0_15 = arith.constant 0 : index
    %c0_16 = arith.constant 0 : index
    %c1_17 = arith.constant 1 : index
    %22 = vector.load %arg4[%c0_15, %c0_16, %c1_17] : memref<1x128x2xf32, #tpu.memory_space<vmem>>, vector<1x128x1xf32>
    %23 = vector.shape_cast %22 : vector<1x128x1xf32> to vector<128x1xf32>
    %24 = vector.shape_cast %21 : vector<128x1xf32> to vector<1x128x1xf32>
    tpu.vector_store %arg4[%c0_15, %c0_16, %c1_17], %24 {strides = array<i32>} : memref<1x128x2xf32, #tpu.memory_space<vmem>>, vector<1x128x1xf32>,
    return
  }
  func.func @transform_0(%arg0: i32, %arg1: i32) -> (i32, i32, i32) {
    %c0_i32 = arith.constant 0 : i32
    %c0_i32_0 = arith.constant 0 : i32
    return %arg0, %c0_i32, %arg1 : i32, i32, i32
  }
  func.func @transform_1(%arg0: i32, %arg1: i32) -> (i32, i32) {
    %c0_i32 = arith.constant 0 : i32
    %c0_i32_0 = arith.constant 0 : i32
    %c0_i32_1 = arith.constant 0 : i32
    return %c0_i32, %c0_i32_0 : i32, i32
  }
  func.func @transform_2(%arg0: i32, %arg1: i32) -> (i32, i32, i32) {
    %c0_i32 = arith.constant 0 : i32
    %c0_i32_0 = arith.constant 0 : i32
    %c0_i32_1 = arith.constant 0 : i32
    return %arg0, %c0_i32, %c0_i32_0 : i32, i32, i32
  }
}

module attributes {stable_mosaic.version = 11 : i64} {
  func.func @kernel(%arg0: i32, %arg1: i32, %arg2: memref<1x4x256xf32, #tpu.memory_space<vmem>>, %arg3: memref<128x4xbf16, #tpu.memory_space<vmem>>, %arg4: memref<128x128xbf16, #tpu.memory_space<vmem>>, %arg5: memref<128x1xf32, #tpu.memory_space<vmem>>, %arg6: memref<128x1xf32, #tpu.memory_space<vmem>>, %arg7: memref<1x4x256xbf16, #tpu.memory_space<vmem>>, %arg8: memref<1x1x128x2xf32, #tpu.memory_space<vmem>>) attributes {dimension_semantics = [#tpu.dimension_semantics<parallel>, #tpu.dimension_semantics<parallel>], iteration_bounds = array<i64: 2, 1>, scalar_prefetch = 0 : i64, scratch_operands = 0 : i64, tpu.core_type = #tpu.core_type<tc>, window_params = [{transform_indices = @transform_0, window_bounds = array<i64: 1, 4, 256>}, {pipeline_mode = #tpu.pipeline_mode<synchronous>, transform_indices = @transform_1, window_bounds = array<i64: 128, 4>}, {pipeline_mode = #tpu.pipeline_mode<synchronous>, transform_indices = @transform_2, window_bounds = array<i64: 128, 128>}, {pipeline_mode = #tpu.pipeline_mode<synchronous>, transform_indices = @transform_3, window_bounds = array<i64: 128, 1>}, {pipeline_mode = #tpu.pipeline_mode<synchronous>, transform_indices = @transform_4, window_bounds = array<i64: 128, 1>}, {transform_indices = @transform_5, window_bounds = array<i64: 1, 4, 256>}, {transform_indices = @transform_6, window_bounds = array<i64: 1, 1, 128, 2>}]} {
    %c0 = arith.constant 0 : index
    %c0_0 = arith.constant 0 : index
    %c0_1 = arith.constant 0 : index
    %0 = vector.load %arg2[%c0, %c0_0, %c0_1] : memref<1x4x256xf32, #tpu.memory_space<vmem>>, vector<1x4x256xf32>
    %1 = vector.shape_cast %0 : vector<1x4x256xf32> to vector<4x256xf32>
    %2 = arith.truncf %1 : vector<4x256xf32> to vector<4x256xbf16>
    %c0_2 = arith.constant 0 : index
    %c0_3 = arith.constant 0 : index
    %3 = vector.load %arg3[%c0_2, %c0_3] : memref<128x4xbf16, #tpu.memory_space<vmem>>, vector<128x4xbf16>
    %cst = arith.constant dense<0.000000e+00> : vector<128x256xf32>
    %4 = tpu.matmul %3, %2, %cst {dimension_numbers = #tpu.dot_dimension_numbers<[1], [0], [0], [1], [0, 0, 1, 1], [], []>} : vector<128x4xbf16>, vector<4x256xbf16>, vector<128x256xf32> -> vector<128x256xf32>
    %c0_4 = arith.constant 0 : index
    %c0_5 = arith.constant 0 : index
    %5 = vector.load %arg5[%c0_4, %c0_5] : memref<128x1xf32, #tpu.memory_space<vmem>>, vector<128x1xf32>
    %6 = vector.broadcast %5 : vector<128x1xf32> to vector<128x256xf32>
    %7 = arith.mulf %6, %4 : vector<128x256xf32>
    %c0_6 = arith.constant 0 : index
    %c0_7 = arith.constant 0 : index
    %8 = vector.load %arg6[%c0_6, %c0_7] : memref<128x1xf32, #tpu.memory_space<vmem>>, vector<128x1xf32>
    %9 = vector.broadcast %8 : vector<128x1xf32> to vector<128x256xf32>
    %10 = arith.addf %7, %9 : vector<128x256xf32>
    %cst_8 = arith.constant 5.000000e-01 : f32
    %11 = vector.broadcast %cst_8 : f32 to vector<128x256xf32>
    %12 = arith.mulf %11, %10 : vector<128x256xf32>
    %cst_9 = arith.constant 4.471500e-02 : f32
    %13 = vector.broadcast %cst_9 : f32 to vector<128x256xf32>
    %14 = arith.mulf %13, %10 : vector<128x256xf32>
    %15 = arith.mulf %14, %10 : vector<128x256xf32>
    %16 = arith.mulf %15, %10 : vector<128x256xf32>
    %17 = arith.addf %10, %16 : vector<128x256xf32>
    %cst_10 = arith.constant 0.797884583 : f32
    %18 = vector.broadcast %cst_10 : f32 to vector<128x256xf32>
    %19 = arith.mulf %18, %17 : vector<128x256xf32>
    %20 = math.tanh %19 : vector<128x256xf32>
    %cst_11 = arith.constant 1.000000e+00 : f32
    %21 = vector.broadcast %cst_11 : f32 to vector<128x256xf32>
    %22 = arith.addf %21, %20 : vector<128x256xf32>
    %23 = arith.mulf %12, %22 : vector<128x256xf32>
    %c0_12 = arith.constant 0 : index
    %c0_13 = arith.constant 0 : index
    %24 = vector.load %arg4[%c0_12, %c0_13] : memref<128x128xbf16, #tpu.memory_space<vmem>>, vector<128x128xbf16>
    %25 = arith.truncf %23 : vector<128x256xf32> to vector<128x256xbf16>
    %cst_14 = arith.constant dense<0.000000e+00> : vector<128x256xf32>
    %26 = tpu.matmul %24, %25, %cst_14 {dimension_numbers = #tpu.dot_dimension_numbers<[1], [0], [0], [1], [0, 0, 1, 1], [], []>} : vector<128x128xbf16>, vector<128x256xbf16>, vector<128x256xf32> -> vector<128x256xf32>
    %27 = vector.extract_strided_slice %26 {offsets = [0, 0], sizes = [4, 256], strides = [1, 1]} : vector<128x256xf32> to vector<4x256xf32>
    %28 = arith.truncf %27 : vector<4x256xf32> to vector<4x256xbf16>
    %c0_15 = arith.constant 0 : index
    %c0_16 = arith.constant 0 : index
    %c0_17 = arith.constant 0 : index
    %29 = vector.load %arg7[%c0_15, %c0_16, %c0_17] : memref<1x4x256xbf16, #tpu.memory_space<vmem>>, vector<1x4x256xbf16>
    %30 = vector.shape_cast %29 : vector<1x4x256xbf16> to vector<4x256xbf16>
    %31 = vector.shape_cast %28 : vector<4x256xbf16> to vector<1x4x256xbf16>
    tpu.vector_store %arg7[%c0_15, %c0_16, %c0_17], %31 {strides = array<i32>} : memref<1x4x256xbf16, #tpu.memory_space<vmem>>, vector<1x4x256xbf16>,
    %cst_18 = arith.constant dense<0.000000e+00> : vector<128xf32>
    %32 = vector.multi_reduction <add>, %26, %cst_18 [1] : vector<128x256xf32> to vector<128xf32>
    %33 = vector.shape_cast %32 : vector<128xf32> to vector<128x1xf32>
    %c0_19 = arith.constant 0 : index
    %c0_20 = arith.constant 0 : index
    %c0_21 = arith.constant 0 : index
    %c0_22 = arith.constant 0 : index
    %34 = vector.load %arg8[%c0_19, %c0_20, %c0_21, %c0_22] : memref<1x1x128x2xf32, #tpu.memory_space<vmem>>, vector<1x1x128x1xf32>
    %35 = vector.shape_cast %34 : vector<1x1x128x1xf32> to vector<128x1xf32>
    %36 = vector.shape_cast %33 : vector<128x1xf32> to vector<1x1x128x1xf32>
    tpu.vector_store %arg8[%c0_19, %c0_20, %c0_21, %c0_22], %36 {strides = array<i32>} : memref<1x1x128x2xf32, #tpu.memory_space<vmem>>, vector<1x1x128x1xf32>,
    %37 = arith.mulf %26, %26 : vector<128x256xf32>
    %cst_23 = arith.constant dense<0.000000e+00> : vector<128xf32>
    %38 = vector.multi_reduction <add>, %37, %cst_23 [1] : vector<128x256xf32> to vector<128xf32>
    %39 = vector.shape_cast %38 : vector<128xf32> to vector<128x1xf32>
    %c0_24 = arith.constant 0 : index
    %c0_25 = arith.constant 0 : index
    %c0_26 = arith.constant 0 : index
    %c1 = arith.constant 1 : index
    %40 = vector.load %arg8[%c0_24, %c0_25, %c0_26, %c1] : memref<1x1x128x2xf32, #tpu.memory_space<vmem>>, vector<1x1x128x1xf32>
    %41 = vector.shape_cast %40 : vector<1x1x128x1xf32> to vector<128x1xf32>
    %42 = vector.shape_cast %39 : vector<128x1xf32> to vector<1x1x128x1xf32>
    tpu.vector_store %arg8[%c0_24, %c0_25, %c0_26, %c1], %42 {strides = array<i32>} : memref<1x1x128x2xf32, #tpu.memory_space<vmem>>, vector<1x1x128x1xf32>,
    return
  }
  func.func @transform_0(%arg0: i32, %arg1: i32) -> (i32, i32, i32) {
    %c0_i32 = arith.constant 0 : i32
    %c0_i32_0 = arith.constant 0 : i32
    return %arg0, %c0_i32, %arg1 : i32, i32, i32
  }
  func.func @transform_1(%arg0: i32, %arg1: i32) -> (i32, i32) {
    %c0_i32 = arith.constant 0 : i32
    %c0_i32_0 = arith.constant 0 : i32
    %c0_i32_1 = arith.constant 0 : i32
    return %c0_i32, %c0_i32_0 : i32, i32
  }
  func.func @transform_2(%arg0: i32, %arg1: i32) -> (i32, i32) {
    %c0_i32 = arith.constant 0 : i32
    %c0_i32_0 = arith.constant 0 : i32
    %c0_i32_1 = arith.constant 0 : i32
    return %c0_i32, %c0_i32_0 : i32, i32
  }
  func.func @transform_3(%arg0: i32, %arg1: i32) -> (i32, i32) {
    %c0_i32 = arith.constant 0 : i32
    %c0_i32_0 = arith.constant 0 : i32
    %c0_i32_1 = arith.constant 0 : i32
    return %c0_i32, %c0_i32_0 : i32, i32
  }
  func.func @transform_4(%arg0: i32, %arg1: i32) -> (i32, i32) {
    %c0_i32 = arith.constant 0 : i32
    %c0_i32_0 = arith.constant 0 : i32
    %c0_i32_1 = arith.constant 0 : i32
    return %c0_i32, %c0_i32_0 : i32, i32
  }
  func.func @transform_5(%arg0: i32, %arg1: i32) -> (i32, i32, i32) {
    %c0_i32 = arith.constant 0 : i32
    %c0_i32_0 = arith.constant 0 : i32
    return %arg0, %c0_i32, %arg1 : i32, i32, i32
  }
  func.func @transform_6(%arg0: i32, %arg1: i32) -> (i32, i32, i32, i32) {
    %c0_i32 = arith.constant 0 : i32
    %c0_i32_0 = arith.constant 0 : i32
    %c0_i32_1 = arith.constant 0 : i32
    return %arg0, %arg1, %c0_i32, %c0_i32_0 : i32, i32, i32, i32
  }
}

module attributes {stable_mosaic.version = 11 : i64} {
  func.func @_bn2_kernel(%arg0: i32, %arg1: i32, %arg2: memref<1x4x256xbf16, #tpu.memory_space<vmem>>, %arg3: memref<4x1xf32, #tpu.memory_space<vmem>>, %arg4: memref<4x1xf32, #tpu.memory_space<vmem>>, %arg5: memref<1x4x256xf32, #tpu.memory_space<vmem>>) attributes {dimension_semantics = [#tpu.dimension_semantics<parallel>, #tpu.dimension_semantics<parallel>], iteration_bounds = array<i64: 2, 1>, scalar_prefetch = 0 : i64, scratch_operands = 0 : i64, tpu.core_type = #tpu.core_type<tc>, window_params = [{transform_indices = @transform_0, window_bounds = array<i64: 1, 4, 256>}, {pipeline_mode = #tpu.pipeline_mode<synchronous>, transform_indices = @transform_1, window_bounds = array<i64: 4, 1>}, {pipeline_mode = #tpu.pipeline_mode<synchronous>, transform_indices = @transform_2, window_bounds = array<i64: 4, 1>}, {transform_indices = @transform_3, window_bounds = array<i64: 1, 4, 256>}]} {
    %c0 = arith.constant 0 : index
    %c0_0 = arith.constant 0 : index
    %c0_1 = arith.constant 0 : index
    %0 = vector.load %arg2[%c0, %c0_0, %c0_1] : memref<1x4x256xbf16, #tpu.memory_space<vmem>>, vector<1x4x256xbf16>
    %1 = vector.shape_cast %0 : vector<1x4x256xbf16> to vector<4x256xbf16>
    %2 = arith.extf %1 : vector<4x256xbf16> to vector<4x256xf32>
    %c0_2 = arith.constant 0 : index
    %c0_3 = arith.constant 0 : index
    %3 = vector.load %arg3[%c0_2, %c0_3] : memref<4x1xf32, #tpu.memory_space<vmem>>, vector<4x1xf32>
    %4 = vector.broadcast %3 : vector<4x1xf32> to vector<4x256xf32>
    %5 = arith.mulf %4, %2 : vector<4x256xf32>
    %c0_4 = arith.constant 0 : index
    %c0_5 = arith.constant 0 : index
    %6 = vector.load %arg4[%c0_4, %c0_5] : memref<4x1xf32, #tpu.memory_space<vmem>>, vector<4x1xf32>
    %7 = vector.broadcast %6 : vector<4x1xf32> to vector<4x256xf32>
    %8 = arith.addf %5, %7 : vector<4x256xf32>
    %c0_6 = arith.constant 0 : index
    %c0_7 = arith.constant 0 : index
    %c0_8 = arith.constant 0 : index
    %9 = vector.load %arg5[%c0_6, %c0_7, %c0_8] : memref<1x4x256xf32, #tpu.memory_space<vmem>>, vector<1x4x256xf32>
    %10 = vector.shape_cast %9 : vector<1x4x256xf32> to vector<4x256xf32>
    %11 = vector.shape_cast %8 : vector<4x256xf32> to vector<1x4x256xf32>
    tpu.vector_store %arg5[%c0_6, %c0_7, %c0_8], %11 {strides = array<i32>} : memref<1x4x256xf32, #tpu.memory_space<vmem>>, vector<1x4x256xf32>,
    return
  }
  func.func @transform_0(%arg0: i32, %arg1: i32) -> (i32, i32, i32) {
    %c0_i32 = arith.constant 0 : i32
    %c0_i32_0 = arith.constant 0 : i32
    return %arg0, %c0_i32, %arg1 : i32, i32, i32
  }
  func.func @transform_1(%arg0: i32, %arg1: i32) -> (i32, i32) {
    %c0_i32 = arith.constant 0 : i32
    %c0_i32_0 = arith.constant 0 : i32
    %c0_i32_1 = arith.constant 0 : i32
    return %c0_i32, %c0_i32_0 : i32, i32
  }
  func.func @transform_2(%arg0: i32, %arg1: i32) -> (i32, i32) {
    %c0_i32 = arith.constant 0 : i32
    %c0_i32_0 = arith.constant 0 : i32
    %c0_i32_1 = arith.constant 0 : i32
    return %c0_i32, %c0_i32_0 : i32, i32
  }
  func.func @transform_3(%arg0: i32, %arg1: i32) -> (i32, i32, i32) {
    %c0_i32 = arith.constant 0 : i32
    %c0_i32_0 = arith.constant 0 : i32
    return %arg0, %c0_i32, %arg1 : i32, i32, i32
  }
}

</mosaic_0001>

<llo_original>
// kernel: mlp_forward.5
$region0: #{mlp_forward.5}
  #allocation0 [shape = 'u32[]', space=smem, size = 0x4, offset = 0x4, fixed_abs, tag = 'smem constant byte address 0x4 - core index']
  #allocation1 [shape = 'u32[144,128]{1,0:T(1,128)}', space=vmem, size = 0x12000, scoped, tag = 'internal scratch']
  %s0 = inlined_call_operand.vmem [shape: bf16[2,4,256], index: 0, kind: input, shape index: {}]
  %s1 = inlined_call_operand.vmem [shape: f32[4,1], index: 1, kind: input, shape index: {}]
  %s2 = inlined_call_operand.vmem [shape: f32[4,1], index: 2, kind: input, shape index: {}]
  %s3 = inlined_call_operand.vmem [shape: f32[2,4,256], index: 3, kind: output, shape index: {}]
  %s4 = sld [smem:[#allocation0]]
  $region45: #{mlp_forward.5} parent=0
    _
  %s6 = ssub.s32 1, %s4
  %s7 = scalar_select 0, %s6, %s4
  loop: start=0, step=1, limit=4
  $region2: #{mlp_forward.5} parent=0 // loop_pre_header
    _
  $region3: #{mlp_forward.5} parent=0 // loop_header
    %s9 = sphi 0, %s13
    %p10 = scmp.ge.s32.totalorder %s9, 4
    %s16 = sphi 0, %s28
    %s17 = sphi 0, %s24
    %s18 = sphi 0, %s16
    %s19 = sphi 0, %s17
    %s20 = sphi 0, %s18
    %s21 = sphi 0, %s19
    %s33 = sphi 0, %s35
    %s36 = sphi 0, %s33
    %s37 = sphi 0, %s36
    %s53 = sphi 0, %s37
    %s57 = sphi 0, %s57
    %s59 = sphi 0, %s57
    %s60 = sphi 0, %s59
    %s74 = sphi 0, %s60
    %s78 = sphi 0, %s78
    %s80 = sphi 0, %s78
    %s81 = sphi 0, %s80
    %s95 = sphi 0, %s81
    %s103 = sphi 0, %s105
    %s106 = sphi 0, %s103
    %s107 = sphi 0, %s106
    %s123 = sphi 0, %s107
  $region4: #{mlp_forward.5} parent=0 // loop_header_branch
    %12 = sbr.rel (%p10) target = $region8
  $region5: #{mlp_forward.5} parent=0 // loop_body
    %s14 = ssub.s32 %s9, 1
    %s15 = ssub.s32 %s9, 2
    %s22 = sadd.s32 1, %s17
    %p23 = scmp.ge.s32.totalorder %s22, 1
    %s24 = scalar_select %p23, 0, %s22
    %s25 = sadd.s32 1, %s16
    %s26 = scalar_select %p23, %s25, %s16
    %p27 = scmp.ge.s32.totalorder %s26, 2
    %s28 = scalar_select %p27, 0, %s26
    %s29 = ssub.s32 %s16, %s28
    %s30 = ssub.s32 %s17, %s24
    %s31 = sor.u32 %s29, %s30
    %p32 = scmp.eq.s32.totalorder %s31, 0
    %s34 = sadd.s32 %s33, 1
    %s35 = scalar_select %p32, %s33, %s34
    %p38 = pneg %p32
    %p39 = scmp.eq.s32.totalorder %s9, 1
    %p40 = por %p38, %p39
    %p41 = scmp.ne.s32.totalorder %s33, %s36
    %p42 = scmp.eq.s32.totalorder %s9, 0
    %p43 = por %p41, %p42
    %p44 = scmp.ne.s32.totalorder %s33, %s36
    %p45 = scmp.eq.s32.totalorder %s14, 1
    %p46 = por %p44, %p45
    %p47 = scmp.ne.s32.totalorder %s36, %s37
    %p48 = scmp.eq.s32.totalorder %s14, 0
    %p49 = por %p47, %p48
    %p50 = scmp.ne.s32.totalorder %s36, %s37
    %p51 = scmp.eq.s32.totalorder %s15, 1
    %p52 = por %p50, %p51
    %p54 = scmp.ne.s32.totalorder %s37, %s53
    %p55 = scmp.eq.s32.totalorder %s15, 0
    %p56 = por %p54, %p55
    %s58 = sadd.s32 %s57, 1
    %p61 = scmp.eq.s32.totalorder %s9, 1
    %p62 = scmp.ne.s32.totalorder %s57, %s59
    %p63 = scmp.eq.s32.totalorder %s9, 0
    %p64 = por %p62, %p63
    %p65 = scmp.ne.s32.totalorder %s57, %s59
    %p66 = scmp.eq.s32.totalorder %s14, 1
    %p67 = por %p65, %p66
    %p68 = scmp.ne.s32.totalorder %s59, %s60
    %p69 = scmp.eq.s32.totalorder %s14, 0
    %p70 = por %p68, %p69
    %p71 = scmp.ne.s32.totalorder %s59, %s60
    %p72 = scmp.eq.s32.totalorder %s15, 1
    %p73 = por %p71, %p72
    %p75 = scmp.ne.s32.totalorder %s60, %s74
    %p76 = scmp.eq.s32.totalorder %s15, 0
    %p77 = por %p75, %p76
    %s79 = sadd.s32 %s78, 1
    %p82 = scmp.eq.s32.totalorder %s9, 1
    %p83 = scmp.ne.s32.totalorder %s78, %s80
    %p84 = scmp.eq.s32.totalorder %s9, 0
    %p85 = por %p83, %p84
    %p86 = scmp.ne.s32.totalorder %s78, %s80
    %p87 = scmp.eq.s32.totalorder %s14, 1
    %p88 = por %p86, %p87
    %p89 = scmp.ne.s32.totalorder %s80, %s81
    %p90 = scmp.eq.s32.totalorder %s14, 0
    %p91 = por %p89, %p90
    %p92 = scmp.ne.s32.totalorder %s80, %s81
    %p93 = scmp.eq.s32.totalorder %s15, 1
    %p94 = por %p92, %p93
    %p96 = scmp.ne.s32.totalorder %s81, %s95
    %p97 = scmp.eq.s32.totalorder %s15, 0
    %p98 = por %p96, %p97
    %s99 = ssub.s32 %s16, %s28
    %s100 = ssub.s32 %s17, %s24
    %s101 = sor.u32 %s99, %s100
    %p102 = scmp.eq.s32.totalorder %s101, 0
    %s104 = sadd.s32 %s103, 1
    %s105 = scalar_select %p102, %s103, %s104
    %p108 = pneg %p102
    %p109 = scmp.eq.s32.totalorder %s9, 1
    %p110 = por %p108, %p109
    %p111 = scmp.ne.s32.totalorder %s103, %s106
    %p112 = scmp.eq.s32.totalorder %s9, 0
    %p113 = por %p111, %p112
    %p114 = scmp.ne.s32.totalorder %s103, %s106
    %p115 = scmp.eq.s32.totalorder %s14, 1
    %p116 = por %p114, %p115
    %p117 = scmp.ne.s32.totalorder %s106, %s107
    %p118 = scmp.eq.s32.totalorder %s14, 0
    %p119 = por %p117, %p118
    %p120 = scmp.ne.s32.totalorder %s106, %s107
    %p121 = scmp.eq.s32.totalorder %s15, 1
    %p122 = por %p120, %p121
    %p124 = scmp.ne.s32.totalorder %s107, %s123
    %p125 = scmp.eq.s32.totalorder %s15, 0
    %p126 = por %p124, %p125
    %p127 = scmp.le.s32.totalorder 1, %s9
    %p128 = scmp.lt.s32.totalorder %s9, 3
    %p129 = pnand %p127, %p128
    %p130 = pneg %p129
    // Predicated region
    $region9: #{mlp_forward.5} parent=5 // pred_check
      _
    $region10: #{mlp_forward.5} parent=5 // pred_check_branch
      %132 = sbr.rel (%p129) target = $region12
    $region11: #{mlp_forward.5} parent=5 // pred_region
      %s133 = ssub.s32 %s9, 1
      // Predicated region
      $region13: #{mlp_forward.5} parent=11 // pred_check
        %p134 = pneg %p70
      $region14: #{mlp_forward.5} parent=11 // pred_check_branch
        %136 = sbr.rel (%p134) target = $region16
      $region15: #{mlp_forward.5} parent=11 // pred_region
        _
      $region16: #{mlp_forward.5} parent=11 // pred_fallthru
        _
      // Predicated region
      $region17: #{mlp_forward.5} parent=11 // pred_check
        %p137 = pneg %p91
      $region18: #{mlp_forward.5} parent=11 // pred_check_branch
        %139 = sbr.rel (%p137) target = $region20
      $region19: #{mlp_forward.5} parent=11 // pred_region
        _
      $region20: #{mlp_forward.5} parent=11 // pred_fallthru
        _
    $region12: #{mlp_forward.5} parent=5 // pred_fallthru
      _
    %p140 = scmp.lt.s32.totalorder %s9, 2
    // Predicated region
    $region21: #{mlp_forward.5} parent=5 // pred_check
      %p141 = pneg %p140
    $region22: #{mlp_forward.5} parent=5 // pred_check_branch
      %143 = sbr.rel (%p141) target = $region24
    $region23: #{mlp_forward.5} parent=5 // pred_region
      // Predicated region
      $region25: #{mlp_forward.5} parent=23 // pred_check
        %p144 = pneg %p43
      $region26: #{mlp_forward.5} parent=23 // pred_check_branch
        %146 = sbr.rel (%p144) target = $region28
      $region27: #{mlp_forward.5} parent=23 // pred_region
        %s147 = smul.u32 2, %s17
        %p148 = scmp.lt.s32.totalorder %s16, 1
        %s149 = scalar_select %p148, %s16, 1
        %p150 = scmp.lt.s32.totalorder %s147, 1
        %s151 = scalar_select %p150, %s147, 1
        %s152 = smul.addr %s149, 2
        %s153 = sadd.s32 %s151, %s152
        %s154 = smul.addr %s153, 2
        %s155 = scalar_lea.vmem %s0, %s154
        %s156 = smul.u32 2, %s17
      $region28: #{mlp_forward.5} parent=23 // pred_fallthru
        _
    $region24: #{mlp_forward.5} parent=5 // pred_fallthru
      _
    %p157 = scmp.le.s32.totalorder 1, %s9
    %p158 = scmp.lt.s32.totalorder %s9, 3
    %p159 = pnand %p157, %p158
    %p160 = pneg %p159
    // Predicated region
    $region29: #{mlp_forward.5} parent=5 // pred_check
      _
    $region30: #{mlp_forward.5} parent=5 // pred_check_branch
      %162 = sbr.rel (%p159) target = $region32
    $region31: #{mlp_forward.5} parent=5 // pred_region
      %s163 = ssub.s32 %s9, 1
      %s164 = smul.u32 2, %s19
      %p165 = scmp.lt.s32.totalorder %s18, 1
      %s166 = scalar_select %p165, %s18, 1
      %p167 = scmp.lt.s32.totalorder %s164, 1
      %s168 = scalar_select %p167, %s164, 1
      %s169 = smul.addr %s166, 2
      %s170 = sadd.s32 %s168, %s169
      %s171 = smul.addr %s170, 2
      %s172 = scalar_lea.vmem %s0, %s171
      %p173 = pneg %p49
      %p174 = pneg %p46
      %p175 = pneg %p70
      %p176 = pneg %p67
      %p177 = pneg %p91
      %p178 = pneg %p88
      %p179 = pneg %p119
      %p180 = pneg %p116
      %s181 = smul.u32 2, %s19
      %p182 = scmp.lt.s32.totalorder %s18, 1
      %s183 = scalar_select %p182, %s18, 1
      %p184 = scmp.lt.s32.totalorder %s181, 1
      %s185 = scalar_select %p184, %s181, 1
      %s186 = smul.addr %s183, 2
      %s187 = sadd.s32 %s185, %s186
      %s188 = smul.addr %s187, 4
      %s189 = scalar_lea.vmem %s3, %s188
      %s190 = smul.u32 2, %s19
      %p191 = scmp.lt.s32.totalorder %s18, 1
      %s192 = scalar_select %p191, %s18, 1
      %p193 = scmp.lt.s32.totalorder %s190, 1
      %s194 = scalar_select %p193, %s190, 1
      %s195 = smul.addr %s192, 2
      %s196 = sadd.s32 %s194, %s195
      %s197 = smul.addr %s196, 2
      %s198 = scalar_lea.vmem %s0, %s197
      %s199 = smul.u32 2, %s19
      %s200 = smul.u32 2, %s19
      %p201 = scmp.lt.s32.totalorder %s18, 1
      %s202 = scalar_select %p201, %s18, 1
      %p203 = scmp.lt.s32.totalorder %s200, 1
      %s204 = scalar_select %p203, %s200, 1
      %s205 = smul.addr %s202, 2
      %s206 = sadd.s32 %s204, %s205
      %s207 = smul.addr %s206, 4
      %s208 = scalar_lea.vmem %s3, %s207
      %s209 = smul.u32 2, %s19
      %v210 = vld [vmem:[%s198] sm:$0xf]
      %v211 = vunpack.c.l.bf16 %v210
      %v212 = vld [vmem:[%s1] sm:$0xf]
      %214 = vset.pattern.permute.xlu0 0
      %215 = vperm.xlu0 %214, %v212
      %v216 = vpop.permute.xlu0 %215
      %v219 = vcombine.high %v211, %v211
      %v221 = vmul.f32 %v216, %v211
      %v222 = vmul.f32 %v216, %v219
      %v223 = vld [vmem:[%s2] sm:$0xf]
      %225 = vset.pattern.permute.xlu0 0
      %226 = vperm.xlu0 %225, %v223
      %v227 = vpop.permute.xlu0 %226
      %v229 = vadd.f32 %v221, %v227
      %v230 = vadd.f32 %v222, %v227
      %v233 = vcombine.low %v229, %v230
      %235 = vst [vmem:[%s208] sm:$0xff] %v233
      %s236 = smul.u32 2, %s19
      %p237 = scmp.lt.s32.totalorder %s18, 1
      %s238 = scalar_select %p237, %s18, 1
      %p239 = scmp.lt.s32.totalorder %s236, 1
      %s240 = scalar_select %p239, %s236, 1
      %s241 = smul.addr %s238, 2
      %s242 = sadd.s32 %s240, %s241
      %s243 = smul.addr %s242, 4
      %s244 = scalar_lea.vmem %s3, %s243
      // Predicated region
      $region33: #{mlp_forward.5} parent=31 // pred_check
        %p245 = pneg %p116
      $region34: #{mlp_forward.5} parent=31 // pred_check_branch
        %247 = sbr.rel (%p245) target = $region36
      $region35: #{mlp_forward.5} parent=31 // pred_region
        %s248 = smul.u32 2, %s19
      $region36: #{mlp_forward.5} parent=31 // pred_fallthru
        _
    $region32: #{mlp_forward.5} parent=5 // pred_fallthru
      _
    %p249 = scmp.le.s32.totalorder 2, %s9
    // Predicated region
    $region37: #{mlp_forward.5} parent=5 // pred_check
      %p250 = pneg %p249
    $region38: #{mlp_forward.5} parent=5 // pred_check_branch
      %252 = sbr.rel (%p250) target = $region40
    $region39: #{mlp_forward.5} parent=5 // pred_region
      %s253 = ssub.s32 %s9, 2
      // Predicated region
      $region41: #{mlp_forward.5} parent=39 // pred_check
        %p254 = pneg %p122
      $region42: #{mlp_forward.5} parent=39 // pred_check_branch
        %256 = sbr.rel (%p254) target = $region44
      $region43: #{mlp_forward.5} parent=39 // pred_region
        %s257 = smul.u32 2, %s21
        %p258 = scmp.lt.s32.totalorder %s20, 1
        %s259 = scalar_select %p258, %s20, 1
        %p260 = scmp.lt.s32.totalorder %s257, 1
        %s261 = scalar_select %p260, %s257, 1
        %s262 = smul.addr %s259, 2
        %s263 = sadd.s32 %s261, %s262
        %s264 = smul.addr %s263, 4
        %s265 = scalar_lea.vmem %s3, %s264
      $region44: #{mlp_forward.5} parent=39 // pred_fallthru
        _
    $region40: #{mlp_forward.5} parent=5 // pred_fallthru
      _
  $region6: #{mlp_forward.5} parent=0 // loop_footer
    %s13 = sadd.s32 1, %s9
  $region7: #{mlp_forward.5} parent=0 // loop_footer_branch
    %8 = sbr.rel target = $region3
  $region8: #{mlp_forward.5} parent=0 // loop_exit
    _

// kernel: mlp_forward.3
$region0: #{mlp_forward.3}
  #allocation0 [shape = 'u32[]', space=smem, size = 0x4, offset = 0x4, fixed_abs, tag = 'smem constant byte address 0x4 - core index']
  #allocation1 [shape = 'u32[144,128]{1,0:T(1,128)}', space=vmem, size = 0x12000, scoped, tag = 'internal scratch']
  %s0 = inlined_call_operand.vmem [shape: f32[2,4,256], index: 0, kind: input, shape index: {}]
  %s1 = inlined_call_operand.vmem [shape: bf16[128,4], index: 1, kind: input, shape index: {}]
  %s2 = inlined_call_operand.vmem [shape: f32[2,128,2], index: 2, kind: output, shape index: {}]
  %s3 = sld [smem:[#allocation0]]
  $region45: #{mlp_forward.3} parent=0
    _
  %s5 = ssub.s32 1, %s3
  %s6 = scalar_select 0, %s5, %s3
  loop: start=0, step=1, limit=4
  $region2: #{mlp_forward.3} parent=0 // loop_pre_header
    _
  $region3: #{mlp_forward.3} parent=0 // loop_header
    %s8 = sphi 0, %s12
    %p9 = scmp.ge.s32.totalorder %s8, 4
    %s15 = sphi 0, %s27
    %s16 = sphi 0, %s23
    %s17 = sphi 0, %s15
    %s18 = sphi 0, %s16
    %s19 = sphi 0, %s17
    %s20 = sphi 0, %s18
    %s32 = sphi 0, %s34
    %s35 = sphi 0, %s32
    %s36 = sphi 0, %s35
    %s52 = sphi 0, %s36
    %s56 = sphi 0, %s56
    %s58 = sphi 0, %s56
    %s59 = sphi 0, %s58
    %s73 = sphi 0, %s59
    %s79 = sphi 0, %s81
    %s82 = sphi 0, %s79
    %s83 = sphi 0, %s82
    %s99 = sphi 0, %s83
  $region4: #{mlp_forward.3} parent=0 // loop_header_branch
    %11 = sbr.rel (%p9) target = $region8
  $region5: #{mlp_forward.3} parent=0 // loop_body
    %s13 = ssub.s32 %s8, 1
    %s14 = ssub.s32 %s8, 2
    %s21 = sadd.s32 1, %s16
    %p22 = scmp.ge.s32.totalorder %s21, 1
    %s23 = scalar_select %p22, 0, %s21
    %s24 = sadd.s32 1, %s15
    %s25 = scalar_select %p22, %s24, %s15
    %p26 = scmp.ge.s32.totalorder %s25, 2
    %s27 = scalar_select %p26, 0, %s25
    %s28 = ssub.s32 %s15, %s27
    %s29 = ssub.s32 %s16, %s23
    %s30 = sor.u32 %s28, %s29
    %p31 = scmp.eq.s32.totalorder %s30, 0
    %s33 = sadd.s32 %s32, 1
    %s34 = scalar_select %p31, %s32, %s33
    %p37 = pneg %p31
    %p38 = scmp.eq.s32.totalorder %s8, 1
    %p39 = por %p37, %p38
    %p40 = scmp.ne.s32.totalorder %s32, %s35
    %p41 = scmp.eq.s32.totalorder %s8, 0
    %p42 = por %p40, %p41
    %p43 = scmp.ne.s32.totalorder %s32, %s35
    %p44 = scmp.eq.s32.totalorder %s13, 1
    %p45 = por %p43, %p44
    %p46 = scmp.ne.s32.totalorder %s35, %s36
    %p47 = scmp.eq.s32.totalorder %s13, 0
    %p48 = por %p46, %p47
    %p49 = scmp.ne.s32.totalorder %s35, %s36
    %p50 = scmp.eq.s32.totalorder %s14, 1
    %p51 = por %p49, %p50
    %p53 = scmp.ne.s32.totalorder %s36, %s52
    %p54 = scmp.eq.s32.totalorder %s14, 0
    %p55 = por %p53, %p54
    %s57 = sadd.s32 %s56, 1
    %p60 = scmp.eq.s32.totalorder %s8, 1
    %p61 = scmp.ne.s32.totalorder %s56, %s58
    %p62 = scmp.eq.s32.totalorder %s8, 0
    %p63 = por %p61, %p62
    %p64 = scmp.ne.s32.totalorder %s56, %s58
    %p65 = scmp.eq.s32.totalorder %s13, 1
    %p66 = por %p64, %p65
    %p67 = scmp.ne.s32.totalorder %s58, %s59
    %p68 = scmp.eq.s32.totalorder %s13, 0
    %p69 = por %p67, %p68
    %p70 = scmp.ne.s32.totalorder %s58, %s59
    %p71 = scmp.eq.s32.totalorder %s14, 1
    %p72 = por %p70, %p71
    %p74 = scmp.ne.s32.totalorder %s59, %s73
    %p75 = scmp.eq.s32.totalorder %s14, 0
    %p76 = por %p74, %p75
    %s77 = ssub.s32 %s15, %s27
    %p78 = scmp.eq.s32.totalorder %s77, 0
    %s80 = sadd.s32 %s79, 1
    %s81 = scalar_select %p78, %s79, %s80
    %p84 = pneg %p78
    %p85 = scmp.eq.s32.totalorder %s8, 1
    %p86 = por %p84, %p85
    %p87 = scmp.ne.s32.totalorder %s79, %s82
    %p88 = scmp.eq.s32.totalorder %s8, 0
    %p89 = por %p87, %p88
    %p90 = scmp.ne.s32.totalorder %s79, %s82
    %p91 = scmp.eq.s32.totalorder %s13, 1
    %p92 = por %p90, %p91
    %p93 = scmp.ne.s32.totalorder %s82, %s83
    %p94 = scmp.eq.s32.totalorder %s13, 0
    %p95 = por %p93, %p94
    %p96 = scmp.ne.s32.totalorder %s82, %s83
    %p97 = scmp.eq.s32.totalorder %s14, 1
    %p98 = por %p96, %p97
    %p100 = scmp.ne.s32.totalorder %s83, %s99
    %p101 = scmp.eq.s32.totalorder %s14, 0
    %p102 = por %p100, %p101
    %p103 = scmp.le.s32.totalorder 1, %s8
    %p104 = scmp.lt.s32.totalorder %s8, 3
    %p105 = pnand %p103, %p104
    %p106 = pneg %p105
    // Predicated region
    $region9: #{mlp_forward.3} parent=5 // pred_check
      _
    $region10: #{mlp_forward.3} parent=5 // pred_check_branch
      %108 = sbr.rel (%p105) target = $region12
    $region11: #{mlp_forward.3} parent=5 // pred_region
      %s109 = ssub.s32 %s8, 1
      // Predicated region
      $region13: #{mlp_forward.3} parent=11 // pred_check
        %p110 = pneg %p69
      $region14: #{mlp_forward.3} parent=11 // pred_check_branch
        %112 = sbr.rel (%p110) target = $region16
      $region15: #{mlp_forward.3} parent=11 // pred_region
        _
      $region16: #{mlp_forward.3} parent=11 // pred_fallthru
        _
    $region12: #{mlp_forward.3} parent=5 // pred_fallthru
      _
    %p113 = scmp.lt.s32.totalorder %s8, 2
    // Predicated region
    $region17: #{mlp_forward.3} parent=5 // pred_check
      %p114 = pneg %p113
    $region18: #{mlp_forward.3} parent=5 // pred_check_branch
      %116 = sbr.rel (%p114) target = $region20
    $region19: #{mlp_forward.3} parent=5 // pred_region
      // Predicated region
      $region21: #{mlp_forward.3} parent=19 // pred_check
        %p117 = pneg %p42
      $region22: #{mlp_forward.3} parent=19 // pred_check_branch
        %119 = sbr.rel (%p117) target = $region24
      $region23: #{mlp_forward.3} parent=19 // pred_region
        %s120 = smul.u32 2, %s16
        %p121 = scmp.lt.s32.totalorder %s15, 1
        %s122 = scalar_select %p121, %s15, 1
        %p123 = scmp.lt.s32.totalorder %s120, 1
        %s124 = scalar_select %p123, %s120, 1
        %s125 = smul.addr %s122, 2
        %s126 = sadd.s32 %s124, %s125
        %s127 = smul.addr %s126, 4
        %s128 = scalar_lea.vmem %s0, %s127
        %s129 = smul.u32 2, %s16
      $region24: #{mlp_forward.3} parent=19 // pred_fallthru
        _
    $region20: #{mlp_forward.3} parent=5 // pred_fallthru
      _
    %p130 = scmp.le.s32.totalorder 1, %s8
    %p131 = scmp.lt.s32.totalorder %s8, 3
    %p132 = pnand %p130, %p131
    %p133 = pneg %p132
    // Predicated region
    $region25: #{mlp_forward.3} parent=5 // pred_check
      _
    $region26: #{mlp_forward.3} parent=5 // pred_check_branch
      %135 = sbr.rel (%p132) target = $region28
    $region27: #{mlp_forward.3} parent=5 // pred_region
      %s136 = ssub.s32 %s8, 1
      %s137 = smul.u32 2, %s18
      %p138 = scmp.lt.s32.totalorder %s17, 1
      %s139 = scalar_select %p138, %s17, 1
      %p140 = scmp.lt.s32.totalorder %s137, 1
      %s141 = scalar_select %p140, %s137, 1
      %s142 = smul.addr %s139, 2
      %s143 = sadd.s32 %s141, %s142
      %s144 = smul.addr %s143, 4
      %s145 = scalar_lea.vmem %s0, %s144
      %p146 = pneg %p48
      %p147 = pneg %p45
      %p148 = pneg %p69
      %p149 = pneg %p66
      %p150 = pneg %p95
      %p151 = pneg %p92
      %p152 = scmp.lt.s32.totalorder %s17, 1
      %s153 = scalar_select %p152, %s17, 1
      %s154 = smul.addr %s153, 16
      %s155 = smul.addr %s154, 8
      %s156 = scalar_lea.vmem %s2, %s155
      %s157 = smul.u32 2, %s18
      %p158 = scmp.lt.s32.totalorder %s17, 1
      %s159 = scalar_select %p158, %s17, 1
      %p160 = scmp.lt.s32.totalorder %s157, 1
      %s161 = scalar_select %p160, %s157, 1
      %s162 = smul.addr %s159, 2
      %s163 = sadd.s32 %s161, %s162
      %s164 = smul.addr %s163, 4
      %s165 = scalar_lea.vmem %s0, %s164
      %s166 = smul.u32 2, %s18
      %p167 = scmp.lt.s32.totalorder %s17, 1
      %s168 = scalar_select %p167, %s17, 1
      %s169 = smul.addr %s168, 16
      %s170 = smul.addr %s169, 8
      %s171 = scalar_lea.vmem %s2, %s170
      %v173 = vld [vmem:[%s165] sm:$0xff]
      %v175 = vcombine.high %v173, %v173
      %v177 = vpack.c.bf16 %v173, %v173
      %v178 = vpack.c.bf16 %v175, %v175
      %v179 = vld [vmem:[%s1] sm:$0xf]
      %v180 = vld [vmem:[%s1 + $0x4] sm:$0xf]
      %v181 = vld [vmem:[%s1 + $0x8] sm:$0xf]
      %v182 = vld [vmem:[%s1 + $0xc] sm:$0xf]
      %v183 = vld [vmem:[%s1 + $0x10] sm:$0xf]
      %v184 = vld [vmem:[%s1 + $0x14] sm:$0xf]
      %v185 = vld [vmem:[%s1 + $0x18] sm:$0xf]
      %v186 = vld [vmem:[%s1 + $0x1c] sm:$0xf]
      %v187 = vld [vmem:[%s1 + $0x20] sm:$0xf]
      %v188 = vld [vmem:[%s1 + $0x24] sm:$0xf]
      %v189 = vld [vmem:[%s1 + $0x28] sm:$0xf]
      %v190 = vld [vmem:[%s1 + $0x2c] sm:$0xf]
      %v191 = vld [vmem:[%s1 + $0x30] sm:$0xf]
      %v192 = vld [vmem:[%s1 + $0x34] sm:$0xf]
      %v193 = vld [vmem:[%s1 + $0x38] sm:$0xf]
      %v194 = vld [vmem:[%s1 + $0x3c] sm:$0xf]
      %v211 = vunpack.c.l.b16 %v179
      %v212 = vunpack.c.l.b16 %v180
      %v213 = vunpack.c.l.b16 %v181
      %v214 = vunpack.c.l.b16 %v182
      %v215 = vunpack.c.l.b16 %v183
      %v216 = vunpack.c.l.b16 %v184
      %v217 = vunpack.c.l.b16 %v185
      %v218 = vunpack.c.l.b16 %v186
      %v219 = vunpack.c.l.b16 %v187
      %v220 = vunpack.c.l.b16 %v188
      %v221 = vunpack.c.l.b16 %v189
      %v222 = vunpack.c.l.b16 %v190
      %v223 = vunpack.c.l.b16 %v191
      %v224 = vunpack.c.l.b16 %v192
      %v225 = vunpack.c.l.b16 %v193
      %v226 = vunpack.c.l.b16 %v194
      %v227 = vpack.c.b16 %v212, %v211
      %v228 = vpack.c.b16 %v214, %v213
      %v229 = vpack.c.b16 %v216, %v215
      %v230 = vpack.c.b16 %v218, %v217
      %v231 = vpack.c.b16 %v220, %v219
      %v232 = vpack.c.b16 %v222, %v221
      %v233 = vpack.c.b16 %v224, %v223
      %v234 = vpack.c.b16 %v226, %v225
      %vm235 = vcmask 31744
      %v237 = vsel %vm235, %v227, 0
      %v240 = vsel %vm235, %v228, 0
      %v243 = vsel %vm235, %v229, 0
      %v246 = vsel %vm235, %v230, 0
      %v249 = vsel %vm235, %v231, 0
      %v252 = vsel %vm235, %v232, 0
      %v255 = vsel %vm235, %v233, 0
      %v258 = vsel %vm235, %v234, 0
      %vm260 = vcmask 1041408
      %v262 = vsel %vm260, %v177, 0
      %v265 = vsel %vm260, %v178, 0
      %267 = vmatprep.subr.bf16.mxu0 %v265
      %268 = vmatpush1.bf16.msra.mxu0 %v262
      %269 = vmatprep.subr.bf16.mxu0 0
      %270 = vmatpush1.bf16.msra.mxu0 0
      %271 = vmatprep.subr.bf16.mxu0 0
      %272 = vmatpush1.bf16.msra.mxu0 0
      %273 = vmatprep.subr.bf16.mxu0 0
      %274 = vmatpush1.bf16.msra.mxu0 0
      %275 = vmatprep.subr.bf16.mxu0 0
      %276 = vmatpush1.bf16.msra.mxu0 0
      %277 = vmatprep.subr.bf16.mxu0 0
      %278 = vmatpush1.bf16.msra.mxu0 0
      %279 = vmatprep.subr.bf16.mxu0 0
      %280 = vmatpush1.bf16.msra.mxu0 0
      %281 = vmatprep.subr.bf16.mxu0 0
      %282 = vmatpush1.bf16.msra.mxu0 0
      %283 = vmatprep.subr.bf16.mxu0 0
      %284 = vmatpush1.bf16.msra.mxu0 0
      %285 = vmatprep.subr.bf16.mxu0 0
      %286 = vmatpush1.bf16.msra.mxu0 0
      %287 = vmatprep.subr.bf16.mxu0 0
      %288 = vmatpush1.bf16.msra.mxu0 0
      %289 = vmatprep.subr.bf16.mxu0 0
      %290 = vmatpush1.bf16.msra.mxu0 0
      %291 = vmatprep.subr.bf16.mxu0 0
      %292 = vmatpush1.bf16.msra.mxu0 0
      %293 = vmatprep.subr.bf16.mxu0 0
      %294 = vmatpush1.bf16.msra.mxu0 0
      %295 = vmatprep.subr.bf16.mxu0 0
      %296 = vmatpush1.bf16.msra.mxu0 0
      %297 = vmatprep.subr.bf16.mxu0 0
      %298 = vmatpush1.bf16.msra.mxu0 0
      %299 = vmatprep.mubr.bf16.mxu0 0
      %300 = vmatmul.mubr.bf16.gmra.mrb[0].mxu0 %v237
      %v301 = vpop.f32.mrb[0].mxu0
      %v302 = vadd.f32 0.0, %v301
      %v303 = vpop.f32.mrb[0].mxu0
      %v304 = vadd.f32 0.0, %v303
      %v305 = vpop.f32.mrb[0].mxu0
      %v306 = vadd.f32 0.0, %v305
      %v307 = vpop.f32.mrb[0].mxu0
      %v308 = vadd.f32 0.0, %v307
      %309 = vmatprep.mubr.bf16.mxu0 0
      %310 = vmatmul.mubr.bf16.gmra.mrb[0].mxu0 %v240
      %v311 = vpop.f32.mrb[0].mxu0
      %v312 = vadd.f32 0.0, %v311
      %v313 = vpop.f32.mrb[0].mxu0
      %v314 = vadd.f32 0.0, %v313
      %v315 = vpop.f32.mrb[0].mxu0
      %v316 = vadd.f32 0.0, %v315
      %v317 = vpop.f32.mrb[0].mxu0
      %v318 = vadd.f32 0.0, %v317
      %319 = vmatprep.mubr.bf16.mxu0 0
      %320 = vmatmul.mubr.bf16.gmra.mrb[0].mxu0 %v243
      %v321 = vpop.f32.mrb[0].mxu0
      %v322 = vadd.f32 0.0, %v321
      %v323 = vpop.f32.mrb[0].mxu0
      %v324 = vadd.f32 0.0, %v323
      %v325 = vpop.f32.mrb[0].mxu0
      %v326 = vadd.f32 0.0, %v325
      %v327 = vpop.f32.mrb[0].mxu0
      %v328 = vadd.f32 0.0, %v327
      %329 = vmatprep.mubr.bf16.mxu0 0
      %330 = vmatmul.mubr.bf16.gmra.mrb[0].mxu0 %v246
      %v331 = vpop.f32.mrb[0].mxu0
      %v332 = vadd.f32 0.0, %v331
      %v333 = vpop.f32.mrb[0].mxu0
      %v334 = vadd.f32 0.0, %v333
      %v335 = vpop.f32.mrb[0].mxu0
      %v336 = vadd.f32 0.0, %v335
      %v337 = vpop.f32.mrb[0].mxu0
      %v338 = vadd.f32 0.0, %v337
      %339 = vmatprep.mubr.bf16.mxu0 0
      %340 = vmatmul.mubr.bf16.gmra.mrb[0].mxu0 %v249
      %v341 = vpop.f32.mrb[0].mxu0
      %v342 = vadd.f32 0.0, %v341
      %v343 = vpop.f32.mrb[0].mxu0
      %v344 = vadd.f32 0.0, %v343
      %v345 = vpop.f32.mrb[0].mxu0
      %v346 = vadd.f32 0.0, %v345
      %v347 = vpop.f32.mrb[0].mxu0
      %v348 = vadd.f32 0.0, %v347
      %349 = vmatprep.mubr.bf16.mxu0 0
      %350 = vmatmul.mubr.bf16.gmra.mrb[0].mxu0 %v252
      %v351 = vpop.f32.mrb[0].mxu0
      %v352 = vadd.f32 0.0, %v351
      %v353 = vpop.f32.mrb[0].mxu0
      %v354 = vadd.f32 0.0, %v353
      %v355 = vpop.f32.mrb[0].mxu0
      %v356 = vadd.f32 0.0, %v355
      %v357 = vpop.f32.mrb[0].mxu0
      %v358 = vadd.f32 0.0, %v357
      %359 = vmatprep.mubr.bf16.mxu0 0
      %360 = vmatmul.mubr.bf16.gmra.mrb[0].mxu0 %v255
      %v361 = vpop.f32.mrb[0].mxu0
      %v362 = vadd.f32 0.0, %v361
      %v363 = vpop.f32.mrb[0].mxu0
      %v364 = vadd.f32 0.0, %v363
      %v365 = vpop.f32.mrb[0].mxu0
      %v366 = vadd.f32 0.0, %v365
      %v367 = vpop.f32.mrb[0].mxu0
      %v368 = vadd.f32 0.0, %v367
      %369 = vmatprep.mubr.bf16.mxu0 0
      %370 = vmatmul.mubr.bf16.gmra.mrb[0].mxu0 %v258
      %v371 = vpop.f32.mrb[0].mxu0
      %v372 = vadd.f32 0.0, %v371
      %v373 = vpop.f32.mrb[0].mxu0
      %v374 = vadd.f32 0.0, %v373
      %v375 = vpop.f32.mrb[0].mxu0
      %v376 = vadd.f32 0.0, %v375
      %v377 = vpop.f32.mrb[0].mxu0
      %v378 = vadd.f32 0.0, %v377
      %379 = vdwg.mxu0
      %p380 = scmp.eq.s32.totalorder %s18, 0
      // Predicated region
      $region29: #{mlp_forward.3} parent=27 // pred_check
        %p381 = pneg %p380
      $region30: #{mlp_forward.3} parent=27 // pred_check_branch
        %383 = sbr.rel (%p381) target = $region32
      $region31: #{mlp_forward.3} parent=27 // pred_region
        %vm384 = vcmask 15360
        %385 = vst.msk [vmem:[%s171] sm:$0xff] %vm384, 0.0
        %386 = vst.msk [vmem:[%s171 + $0x8] sm:$0xff] %vm384, 0.0
        %387 = vst.msk [vmem:[%s171 + $0x10] sm:$0xff] %vm384, 0.0
        %388 = vst.msk [vmem:[%s171 + $0x18] sm:$0xff] %vm384, 0.0
        %389 = vst.msk [vmem:[%s171 + $0x20] sm:$0xff] %vm384, 0.0
        %390 = vst.msk [vmem:[%s171 + $0x28] sm:$0xff] %vm384, 0.0
        %391 = vst.msk [vmem:[%s171 + $0x30] sm:$0xff] %vm384, 0.0
        %392 = vst.msk [vmem:[%s171 + $0x38] sm:$0xff] %vm384, 0.0
        %393 = vst.msk [vmem:[%s171 + $0x40] sm:$0xff] %vm384, 0.0
        %394 = vst.msk [vmem:[%s171 + $0x48] sm:$0xff] %vm384, 0.0
        %395 = vst.msk [vmem:[%s171 + $0x50] sm:$0xff] %vm384, 0.0
        %396 = vst.msk [vmem:[%s171 + $0x58] sm:$0xff] %vm384, 0.0
        %397 = vst.msk [vmem:[%s171 + $0x60] sm:$0xff] %vm384, 0.0
        %398 = vst.msk [vmem:[%s171 + $0x68] sm:$0xff] %vm384, 0.0
        %399 = vst.msk [vmem:[%s171 + $0x70] sm:$0xff] %vm384, 0.0
        %400 = vst.msk [vmem:[%s171 + $0x78] sm:$0xff] %vm384, 0.0
      $region32: #{mlp_forward.3} parent=27 // pred_fallthru
        _
      %v401 = vld [vmem:[%s171] sm:$0xff]
      %v402 = vld [vmem:[%s171 + $0x8] sm:$0xff]
      %v403 = vld [vmem:[%s171 + $0x10] sm:$0xff]
      %v404 = vld [vmem:[%s171 + $0x18] sm:$0xff]
      %v405 = vld [vmem:[%s171 + $0x20] sm:$0xff]
      %v406 = vld [vmem:[%s171 + $0x28] sm:$0xff]
      %v407 = vld [vmem:[%s171 + $0x30] sm:$0xff]
      %v408 = vld [vmem:[%s171 + $0x38] sm:$0xff]
      %v409 = vld [vmem:[%s171 + $0x40] sm:$0xff]
      %v410 = vld [vmem:[%s171 + $0x48] sm:$0xff]
      %v411 = vld [vmem:[%s171 + $0x50] sm:$0xff]
      %v412 = vld [vmem:[%s171 + $0x58] sm:$0xff]
      %v413 = vld [vmem:[%s171 + $0x60] sm:$0xff]
      %v414 = vld [vmem:[%s171 + $0x68] sm:$0xff]
      %v415 = vld [vmem:[%s171 + $0x70] sm:$0xff]
      %v416 = vld [vmem:[%s171 + $0x78] sm:$0xff]
      %v417 = vadd.f32 %v302, %v304
      %418 = vadd.xlane.f32.xlu0 %v417
      %v419 = vpop.xlane.xlu0 %418
      %v420 = vadd.f32 %v306, %v308
      %421 = vadd.xlane.f32.xlu0 %v420
      %v422 = vpop.xlane.xlu0 %421
      %v423 = vadd.f32 %v312, %v314
      %424 = vadd.xlane.f32.xlu0 %v423
      %v425 = vpop.xlane.xlu0 %424
      %v426 = vadd.f32 %v316, %v318
      %427 = vadd.xlane.f32.xlu0 %v426
      %v428 = vpop.xlane.xlu0 %427
      %v429 = vadd.f32 %v322, %v324
      %430 = vadd.xlane.f32.xlu0 %v429
      %v431 = vpop.xlane.xlu0 %430
      %v432 = vadd.f32 %v326, %v328
      %433 = vadd.xlane.f32.xlu0 %v432
      %v434 = vpop.xlane.xlu0 %433
      %v435 = vadd.f32 %v332, %v334
      %436 = vadd.xlane.f32.xlu0 %v435
      %v437 = vpop.xlane.xlu0 %436
      %v438 = vadd.f32 %v336, %v338
      %439 = vadd.xlane.f32.xlu0 %v438
      %v440 = vpop.xlane.xlu0 %439
      %v441 = vadd.f32 %v342, %v344
      %442 = vadd.xlane.f32.xlu0 %v441
      %v443 = vpop.xlane.xlu0 %442
      %v444 = vadd.f32 %v346, %v348
      %445 = vadd.xlane.f32.xlu0 %v444
      %v446 = vpop.xlane.xlu0 %445
      %v447 = vadd.f32 %v352, %v354
      %448 = vadd.xlane.f32.xlu0 %v447
      %v449 = vpop.xlane.xlu0 %448
      %v450 = vadd.f32 %v356, %v358
      %451 = vadd.xlane.f32.xlu0 %v450
      %v452 = vpop.xlane.xlu0 %451
      %v453 = vadd.f32 %v362, %v364
      %454 = vadd.xlane.f32.xlu0 %v453
      %v455 = vpop.xlane.xlu0 %454
      %v456 = vadd.f32 %v366, %v368
      %457 = vadd.xlane.f32.xlu0 %v456
      %v458 = vpop.xlane.xlu0 %457
      %v459 = vadd.f32 %v372, %v374
      %460 = vadd.xlane.f32.xlu0 %v459
      %v461 = vpop.xlane.xlu0 %460
      %v462 = vadd.f32 %v376, %v378
      %463 = vadd.xlane.f32.xlu0 %v462
      %v464 = vpop.xlane.xlu0 %463
      %v465 = vadd.f32 %v401, %v419
      %v466 = vadd.f32 %v402, %v422
      %v467 = vadd.f32 %v403, %v425
      %v468 = vadd.f32 %v404, %v428
      %v469 = vadd.f32 %v405, %v431
      %v470 = vadd.f32 %v406, %v434
      %v471 = vadd.f32 %v407, %v437
      %v472 = vadd.f32 %v408, %v440
      %v473 = vadd.f32 %v409, %v443
      %v474 = vadd.f32 %v410, %v446
      %v475 = vadd.f32 %v411, %v449
      %v476 = vadd.f32 %v412, %v452
      %v477 = vadd.f32 %v413, %v455
      %v478 = vadd.f32 %v414, %v458
      %v479 = vadd.f32 %v415, %v461
      %v480 = vadd.f32 %v416, %v464
      %vm481 = vcmask 7168
      %482 = vst.msk [vmem:[%s171] sm:$0xff] %vm481, %v465
      %483 = vst.msk [vmem:[%s171 + $0x8] sm:$0xff] %vm481, %v466
      %484 = vst.msk [vmem:[%s171 + $0x10] sm:$0xff] %vm481, %v467
      %485 = vst.msk [vmem:[%s171 + $0x18] sm:$0xff] %vm481, %v468
      %486 = vst.msk [vmem:[%s171 + $0x20] sm:$0xff] %vm481, %v469
      %487 = vst.msk [vmem:[%s171 + $0x28] sm:$0xff] %vm481, %v470
      %488 = vst.msk [vmem:[%s171 + $0x30] sm:$0xff] %vm481, %v471
      %489 = vst.msk [vmem:[%s171 + $0x38] sm:$0xff] %vm481, %v472
      %490 = vst.msk [vmem:[%s171 + $0x40] sm:$0xff] %vm481, %v473
      %491 = vst.msk [vmem:[%s171 + $0x48] sm:$0xff] %vm481, %v474
      %492 = vst.msk [vmem:[%s171 + $0x50] sm:$0xff] %vm481, %v475
      %493 = vst.msk [vmem:[%s171 + $0x58] sm:$0xff] %vm481, %v476
      %494 = vst.msk [vmem:[%s171 + $0x60] sm:$0xff] %vm481, %v477
      %495 = vst.msk [vmem:[%s171 + $0x68] sm:$0xff] %vm481, %v478
      %496 = vst.msk [vmem:[%s171 + $0x70] sm:$0xff] %vm481, %v479
      %497 = vst.msk [vmem:[%s171 + $0x78] sm:$0xff] %vm481, %v480
      %v498 = vld [vmem:[%s171] sm:$0xff]
      %v499 = vld [vmem:[%s171 + $0x8] sm:$0xff]
      %v500 = vld [vmem:[%s171 + $0x10] sm:$0xff]
      %v501 = vld [vmem:[%s171 + $0x18] sm:$0xff]
      %v502 = vld [vmem:[%s171 + $0x20] sm:$0xff]
      %v503 = vld [vmem:[%s171 + $0x28] sm:$0xff]
      %v504 = vld [vmem:[%s171 + $0x30] sm:$0xff]
      %v505 = vld [vmem:[%s171 + $0x38] sm:$0xff]
      %v506 = vld [vmem:[%s171 + $0x40] sm:$0xff]
      %v507 = vld [vmem:[%s171 + $0x48] sm:$0xff]
      %v508 = vld [vmem:[%s171 + $0x50] sm:$0xff]
      %v509 = vld [vmem:[%s171 + $0x58] sm:$0xff]
      %v510 = vld [vmem:[%s171 + $0x60] sm:$0xff]
      %v511 = vld [vmem:[%s171 + $0x68] sm:$0xff]
      %v512 = vld [vmem:[%s171 + $0x70] sm:$0xff]
      %v513 = vld [vmem:[%s171 + $0x78] sm:$0xff]
      %v514 = vmul.f32 %v302, %v302
      %v515 = vmul.f32 %v304, %v304
      %v516 = vmul.f32 %v306, %v306
      %v517 = vmul.f32 %v308, %v308
      %v518 = vmul.f32 %v312, %v312
      %v519 = vmul.f32 %v314, %v314
      %v520 = vmul.f32 %v316, %v316
      %v521 = vmul.f32 %v318, %v318
      %v522 = vmul.f32 %v322, %v322
      %v523 = vmul.f32 %v324, %v324
      %v524 = vmul.f32 %v326, %v326
      %v525 = vmul.f32 %v328, %v328
      %v526 = vmul.f32 %v332, %v332
      %v527 = vmul.f32 %v334, %v334
      %v528 = vmul.f32 %v336, %v336
      %v529 = vmul.f32 %v338, %v338
      %v530 = vmul.f32 %v342, %v342
      %v531 = vmul.f32 %v344, %v344
      %v532 = vmul.f32 %v346, %v346
      %v533 = vmul.f32 %v348, %v348
      %v534 = vmul.f32 %v352, %v352
      %v535 = vmul.f32 %v354, %v354
      %v536 = vmul.f32 %v356, %v356
      %v537 = vmul.f32 %v358, %v358
      %v538 = vmul.f32 %v362, %v362
      %v539 = vmul.f32 %v364, %v364
      %v540 = vmul.f32 %v366, %v366
      %v541 = vmul.f32 %v368, %v368
      %v542 = vmul.f32 %v372, %v372
      %v543 = vmul.f32 %v374, %v374
      %v544 = vmul.f32 %v376, %v376
      %v545 = vmul.f32 %v378, %v378
      %v546 = vadd.f32 %v514, %v515
      %547 = vadd.xlane.f32.xlu0 %v546
      %v548 = vpop.xlane.xlu0 %547
      %v549 = vadd.f32 %v516, %v517
      %550 = vadd.xlane.f32.xlu0 %v549
      %v551 = vpop.xlane.xlu0 %550
      %v552 = vadd.f32 %v518, %v519
      %553 = vadd.xlane.f32.xlu0 %v552
      %v554 = vpop.xlane.xlu0 %553
      %v555 = vadd.f32 %v520, %v521
      %556 = vadd.xlane.f32.xlu0 %v555
      %v557 = vpop.xlane.xlu0 %556
      %v558 = vadd.f32 %v522, %v523
      %559 = vadd.xlane.f32.xlu0 %v558
      %v560 = vpop.xlane.xlu0 %559
      %v561 = vadd.f32 %v524, %v525
      %562 = vadd.xlane.f32.xlu0 %v561
      %v563 = vpop.xlane.xlu0 %562
      %v564 = vadd.f32 %v526, %v527
      %565 = vadd.xlane.f32.xlu0 %v564
      %v566 = vpop.xlane.xlu0 %565
      %v567 = vadd.f32 %v528, %v529
      %568 = vadd.xlane.f32.xlu0 %v567
      %v569 = vpop.xlane.xlu0 %568
      %v570 = vadd.f32 %v530, %v531
      %571 = vadd.xlane.f32.xlu0 %v570
      %v572 = vpop.xlane.xlu0 %571
      %v573 = vadd.f32 %v532, %v533
      %574 = vadd.xlane.f32.xlu0 %v573
      %v575 = vpop.xlane.xlu0 %574
      %v576 = vadd.f32 %v534, %v535
      %577 = vadd.xlane.f32.xlu0 %v576
      %v578 = vpop.xlane.xlu0 %577
      %v579 = vadd.f32 %v536, %v537
      %580 = vadd.xlane.f32.xlu0 %v579
      %v581 = vpop.xlane.xlu0 %580
      %v582 = vadd.f32 %v538, %v539
      %583 = vadd.xlane.f32.xlu0 %v582
      %v584 = vpop.xlane.xlu0 %583
      %v585 = vadd.f32 %v540, %v541
      %586 = vadd.xlane.f32.xlu0 %v585
      %v587 = vpop.xlane.xlu0 %586
      %v588 = vadd.f32 %v542, %v543
      %589 = vadd.xlane.f32.xlu0 %v588
      %v590 = vpop.xlane.xlu0 %589
      %v591 = vadd.f32 %v544, %v545
      %592 = vadd.xlane.f32.xlu0 %v591
      %v593 = vpop.xlane.xlu0 %592
      %v594 = vadd.f32 %v498, %v548
      %v595 = vadd.f32 %v499, %v551
      %v596 = vadd.f32 %v500, %v554
      %v597 = vadd.f32 %v501, %v557
      %v598 = vadd.f32 %v502, %v560
      %v599 = vadd.f32 %v503, %v563
      %v600 = vadd.f32 %v504, %v566
      %v601 = vadd.f32 %v505, %v569
      %v602 = vadd.f32 %v506, %v572
      %v603 = vadd.f32 %v507, %v575
      %v604 = vadd.f32 %v508, %v578
      %v605 = vadd.f32 %v509, %v581
      %v606 = vadd.f32 %v510, %v584
      %v607 = vadd.f32 %v511, %v587
      %v608 = vadd.f32 %v512, %v590
      %v609 = vadd.f32 %v513, %v593
      %vm610 = vcmask 15368
      %611 = vst.msk [vmem:[%s171] sm:$0xff] %vm610, %v594
      %612 = vst.msk [vmem:[%s171 + $0x8] sm:$0xff] %vm610, %v595
      %613 = vst.msk [vmem:[%s171 + $0x10] sm:$0xff] %vm610, %v596
      %614 = vst.msk [vmem:[%s171 + $0x18] sm:$0xff] %vm610, %v597
      %615 = vst.msk [vmem:[%s171 + $0x20] sm:$0xff] %vm610, %v598
      %616 = vst.msk [vmem:[%s171 + $0x28] sm:$0xff] %vm610, %v599
      %617 = vst.msk [vmem:[%s171 + $0x30] sm:$0xff] %vm610, %v600
      %618 = vst.msk [vmem:[%s171 + $0x38] sm:$0xff] %vm610, %v601
      %619 = vst.msk [vmem:[%s171 + $0x40] sm:$0xff] %vm610, %v602
      %620 = vst.msk [vmem:[%s171 + $0x48] sm:$0xff] %vm610, %v603
      %621 = vst.msk [vmem:[%s171 + $0x50] sm:$0xff] %vm610, %v604
      %622 = vst.msk [vmem:[%s171 + $0x58] sm:$0xff] %vm610, %v605
      %623 = vst.msk [vmem:[%s171 + $0x60] sm:$0xff] %vm610, %v606
      %624 = vst.msk [vmem:[%s171 + $0x68] sm:$0xff] %vm610, %v607
      %625 = vst.msk [vmem:[%s171 + $0x70] sm:$0xff] %vm610, %v608
      %626 = vst.msk [vmem:[%s171 + $0x78] sm:$0xff] %vm610, %v609
      %p627 = scmp.lt.s32.totalorder %s17, 1
      %s628 = scalar_select %p627, %s17, 1
      %s629 = smul.addr %s628, 16
      %s630 = smul.addr %s629, 8
      %s631 = scalar_lea.vmem %s2, %s630
      // Predicated region
      $region33: #{mlp_forward.3} parent=27 // pred_check
        %p632 = pneg %p92
      $region34: #{mlp_forward.3} parent=27 // pred_check_branch
        %634 = sbr.rel (%p632) target = $region36
      $region35: #{mlp_forward.3} parent=27 // pred_region
        _
      $region36: #{mlp_forward.3} parent=27 // pred_fallthru
        _
    $region28: #{mlp_forward.3} parent=5 // pred_fallthru
      _
    %p635 = scmp.le.s32.totalorder 2, %s8
    // Predicated region
    $region37: #{mlp_forward.3} parent=5 // pred_check
      %p636 = pneg %p635
    $region38: #{mlp_forward.3} parent=5 // pred_check_branch
      %638 = sbr.rel (%p636) target = $region40
    $region39: #{mlp_forward.3} parent=5 // pred_region
      %s639 = ssub.s32 %s8, 2
      // Predicated region
      $region41: #{mlp_forward.3} parent=39 // pred_check
        %p640 = pneg %p98
      $region42: #{mlp_forward.3} parent=39 // pred_check_branch
        %642 = sbr.rel (%p640) target = $region44
      $region43: #{mlp_forward.3} parent=39 // pred_region
        %p643 = scmp.lt.s32.totalorder %s19, 1
        %s644 = scalar_select %p643, %s19, 1
        %s645 = smul.addr %s644, 16
        %s646 = smul.addr %s645, 8
        %s647 = scalar_lea.vmem %s2, %s646
      $region44: #{mlp_forward.3} parent=39 // pred_fallthru
        _
    $region40: #{mlp_forward.3} parent=5 // pred_fallthru
      _
  $region6: #{mlp_forward.3} parent=0 // loop_footer
    %s12 = sadd.s32 1, %s8
  $region7: #{mlp_forward.3} parent=0 // loop_footer_branch
    %7 = sbr.rel target = $region3
  $region8: #{mlp_forward.3} parent=0 // loop_exit
    _

// kernel: mlp_forward.4
$region0: #{mlp_forward.4}
  #allocation0 [shape = 'u32[]', space=smem, size = 0x4, offset = 0x4, fixed_abs, tag = 'smem constant byte address 0x4 - core index']
  #allocation1 [shape = 'u32[144,128]{1,0:T(1,128)}', space=vmem, size = 0x12000, scoped, tag = 'internal scratch']
  %s0 = inlined_call_operand.vmem [shape: f32[2,4,256], index: 0, kind: input, shape index: {}]
  %s1 = inlined_call_operand.vmem [shape: bf16[128,4], index: 1, kind: input, shape index: {}]
  %s2 = inlined_call_operand.vmem [shape: bf16[128,128], index: 2, kind: input, shape index: {}]
  %s3 = inlined_call_operand.vmem [shape: f32[128,1], index: 3, kind: input, shape index: {}]
  %s4 = inlined_call_operand.vmem [shape: f32[128,1], index: 4, kind: input, shape index: {}]
  %s5 = inlined_call_operand.vmem [shape: bf16[2,4,256], index: 5, kind: output, shape index: {0}]
  %s6 = inlined_call_operand.vmem [shape: f32[2,1,128,2], index: 6, kind: output, shape index: {1}]
  %7 = xla_tuple %s5, %s6
  %s8 = sld [smem:[#allocation0]]
  $region61: #{mlp_forward.4} parent=0
    _
  %s10 = ssub.s32 1, %s8
  %s11 = scalar_select 0, %s10, %s8
  loop: start=0, step=1, limit=4
  $region2: #{mlp_forward.4} parent=0 // loop_pre_header
    _
  $region3: #{mlp_forward.4} parent=0 // loop_header
    %s13 = sphi 0, %s17
    %p14 = scmp.ge.s32.totalorder %s13, 4
    %s20 = sphi 0, %s32
    %s21 = sphi 0, %s28
    %s22 = sphi 0, %s20
    %s23 = sphi 0, %s21
    %s24 = sphi 0, %s22
    %s25 = sphi 0, %s23
    %s37 = sphi 0, %s39
    %s40 = sphi 0, %s37
    %s41 = sphi 0, %s40
    %s57 = sphi 0, %s41
    %s61 = sphi 0, %s61
    %s63 = sphi 0, %s61
    %s64 = sphi 0, %s63
    %s78 = sphi 0, %s64
    %s82 = sphi 0, %s82
    %s84 = sphi 0, %s82
    %s85 = sphi 0, %s84
    %s99 = sphi 0, %s85
    %s103 = sphi 0, %s103
    %s105 = sphi 0, %s103
    %s106 = sphi 0, %s105
    %s120 = sphi 0, %s106
    %s124 = sphi 0, %s124
    %s126 = sphi 0, %s124
    %s127 = sphi 0, %s126
    %s141 = sphi 0, %s127
    %s149 = sphi 0, %s151
    %s152 = sphi 0, %s149
    %s153 = sphi 0, %s152
    %s169 = sphi 0, %s153
    %s177 = sphi 0, %s179
    %s180 = sphi 0, %s177
    %s181 = sphi 0, %s180
    %s197 = sphi 0, %s181
  $region4: #{mlp_forward.4} parent=0 // loop_header_branch
    %16 = sbr.rel (%p14) target = $region8
  $region5: #{mlp_forward.4} parent=0 // loop_body
    %s18 = ssub.s32 %s13, 1
    %s19 = ssub.s32 %s13, 2
    %s26 = sadd.s32 1, %s21
    %p27 = scmp.ge.s32.totalorder %s26, 1
    %s28 = scalar_select %p27, 0, %s26
    %s29 = sadd.s32 1, %s20
    %s30 = scalar_select %p27, %s29, %s20
    %p31 = scmp.ge.s32.totalorder %s30, 2
    %s32 = scalar_select %p31, 0, %s30
    %s33 = ssub.s32 %s20, %s32
    %s34 = ssub.s32 %s21, %s28
    %s35 = sor.u32 %s33, %s34
    %p36 = scmp.eq.s32.totalorder %s35, 0
    %s38 = sadd.s32 %s37, 1
    %s39 = scalar_select %p36, %s37, %s38
    %p42 = pneg %p36
    %p43 = scmp.eq.s32.totalorder %s13, 1
    %p44 = por %p42, %p43
    %p45 = scmp.ne.s32.totalorder %s37, %s40
    %p46 = scmp.eq.s32.totalorder %s13, 0
    %p47 = por %p45, %p46
    %p48 = scmp.ne.s32.totalorder %s37, %s40
    %p49 = scmp.eq.s32.totalorder %s18, 1
    %p50 = por %p48, %p49
    %p51 = scmp.ne.s32.totalorder %s40, %s41
    %p52 = scmp.eq.s32.totalorder %s18, 0
    %p53 = por %p51, %p52
    %p54 = scmp.ne.s32.totalorder %s40, %s41
    %p55 = scmp.eq.s32.totalorder %s19, 1
    %p56 = por %p54, %p55
    %p58 = scmp.ne.s32.totalorder %s41, %s57
    %p59 = scmp.eq.s32.totalorder %s19, 0
    %p60 = por %p58, %p59
    %s62 = sadd.s32 %s61, 1
    %p65 = scmp.eq.s32.totalorder %s13, 1
    %p66 = scmp.ne.s32.totalorder %s61, %s63
    %p67 = scmp.eq.s32.totalorder %s13, 0
    %p68 = por %p66, %p67
    %p69 = scmp.ne.s32.totalorder %s61, %s63
    %p70 = scmp.eq.s32.totalorder %s18, 1
    %p71 = por %p69, %p70
    %p72 = scmp.ne.s32.totalorder %s63, %s64
    %p73 = scmp.eq.s32.totalorder %s18, 0
    %p74 = por %p72, %p73
    %p75 = scmp.ne.s32.totalorder %s63, %s64
    %p76 = scmp.eq.s32.totalorder %s19, 1
    %p77 = por %p75, %p76
    %p79 = scmp.ne.s32.totalorder %s64, %s78
    %p80 = scmp.eq.s32.totalorder %s19, 0
    %p81 = por %p79, %p80
    %s83 = sadd.s32 %s82, 1
    %p86 = scmp.eq.s32.totalorder %s13, 1
    %p87 = scmp.ne.s32.totalorder %s82, %s84
    %p88 = scmp.eq.s32.totalorder %s13, 0
    %p89 = por %p87, %p88
    %p90 = scmp.ne.s32.totalorder %s82, %s84
    %p91 = scmp.eq.s32.totalorder %s18, 1
    %p92 = por %p90, %p91
    %p93 = scmp.ne.s32.totalorder %s84, %s85
    %p94 = scmp.eq.s32.totalorder %s18, 0
    %p95 = por %p93, %p94
    %p96 = scmp.ne.s32.totalorder %s84, %s85
    %p97 = scmp.eq.s32.totalorder %s19, 1
    %p98 = por %p96, %p97
    %p100 = scmp.ne.s32.totalorder %s85, %s99
    %p101 = scmp.eq.s32.totalorder %s19, 0
    %p102 = por %p100, %p101
    %s104 = sadd.s32 %s103, 1
    %p107 = scmp.eq.s32.totalorder %s13, 1
    %p108 = scmp.ne.s32.totalorder %s103, %s105
    %p109 = scmp.eq.s32.totalorder %s13, 0
    %p110 = por %p108, %p109
    %p111 = scmp.ne.s32.totalorder %s103, %s105
    %p112 = scmp.eq.s32.totalorder %s18, 1
    %p113 = por %p111, %p112
    %p114 = scmp.ne.s32.totalorder %s105, %s106
    %p115 = scmp.eq.s32.totalorder %s18, 0
    %p116 = por %p114, %p115
    %p117 = scmp.ne.s32.totalorder %s105, %s106
    %p118 = scmp.eq.s32.totalorder %s19, 1
    %p119 = por %p117, %p118
    %p121 = scmp.ne.s32.totalorder %s106, %s120
    %p122 = scmp.eq.s32.totalorder %s19, 0
    %p123 = por %p121, %p122
    %s125 = sadd.s32 %s124, 1
    %p128 = scmp.eq.s32.totalorder %s13, 1
    %p129 = scmp.ne.s32.totalorder %s124, %s126
    %p130 = scmp.eq.s32.totalorder %s13, 0
    %p131 = por %p129, %p130
    %p132 = scmp.ne.s32.totalorder %s124, %s126
    %p133 = scmp.eq.s32.totalorder %s18, 1
    %p134 = por %p132, %p133
    %p135 = scmp.ne.s32.totalorder %s126, %s127
    %p136 = scmp.eq.s32.totalorder %s18, 0
    %p137 = por %p135, %p136
    %p138 = scmp.ne.s32.totalorder %s126, %s127
    %p139 = scmp.eq.s32.totalorder %s19, 1
    %p140 = por %p138, %p139
    %p142 = scmp.ne.s32.totalorder %s127, %s141
    %p143 = scmp.eq.s32.totalorder %s19, 0
    %p144 = por %p142, %p143
    %s145 = ssub.s32 %s20, %s32
    %s146 = ssub.s32 %s21, %s28
    %s147 = sor.u32 %s145, %s146
    %p148 = scmp.eq.s32.totalorder %s147, 0
    %s150 = sadd.s32 %s149, 1
    %s151 = scalar_select %p148, %s149, %s150
    %p154 = pneg %p148
    %p155 = scmp.eq.s32.totalorder %s13, 1
    %p156 = por %p154, %p155
    %p157 = scmp.ne.s32.totalorder %s149, %s152
    %p158 = scmp.eq.s32.totalorder %s13, 0
    %p159 = por %p157, %p158
    %p160 = scmp.ne.s32.totalorder %s149, %s152
    %p161 = scmp.eq.s32.totalorder %s18, 1
    %p162 = por %p160, %p161
    %p163 = scmp.ne.s32.totalorder %s152, %s153
    %p164 = scmp.eq.s32.totalorder %s18, 0
    %p165 = por %p163, %p164
    %p166 = scmp.ne.s32.totalorder %s152, %s153
    %p167 = scmp.eq.s32.totalorder %s19, 1
    %p168 = por %p166, %p167
    %p170 = scmp.ne.s32.totalorder %s153, %s169
    %p171 = scmp.eq.s32.totalorder %s19, 0
    %p172 = por %p170, %p171
    %s173 = ssub.s32 %s20, %s32
    %s174 = ssub.s32 %s21, %s28
    %s175 = sor.u32 %s173, %s174
    %p176 = scmp.eq.s32.totalorder %s175, 0
    %s178 = sadd.s32 %s177, 1
    %s179 = scalar_select %p176, %s177, %s178
    %p182 = pneg %p176
    %p183 = scmp.eq.s32.totalorder %s13, 1
    %p184 = por %p182, %p183
    %p185 = scmp.ne.s32.totalorder %s177, %s180
    %p186 = scmp.eq.s32.totalorder %s13, 0
    %p187 = por %p185, %p186
    %p188 = scmp.ne.s32.totalorder %s177, %s180
    %p189 = scmp.eq.s32.totalorder %s18, 1
    %p190 = por %p188, %p189
    %p191 = scmp.ne.s32.totalorder %s180, %s181
    %p192 = scmp.eq.s32.totalorder %s18, 0
    %p193 = por %p191, %p192
    %p194 = scmp.ne.s32.totalorder %s180, %s181
    %p195 = scmp.eq.s32.totalorder %s19, 1
    %p196 = por %p194, %p195
    %p198 = scmp.ne.s32.totalorder %s181, %s197
    %p199 = scmp.eq.s32.totalorder %s19, 0
    %p200 = por %p198, %p199
    %p201 = scmp.le.s32.totalorder 1, %s13
    %p202 = scmp.lt.s32.totalorder %s13, 3
    %p203 = pnand %p201, %p202
    %p204 = pneg %p203
    // Predicated region
    $region9: #{mlp_forward.4} parent=5 // pred_check
      _
    $region10: #{mlp_forward.4} parent=5 // pred_check_branch
      %206 = sbr.rel (%p203) target = $region12
    $region11: #{mlp_forward.4} parent=5 // pred_region
      %s207 = ssub.s32 %s13, 1
      // Predicated region
      $region13: #{mlp_forward.4} parent=11 // pred_check
        %p208 = pneg %p74
      $region14: #{mlp_forward.4} parent=11 // pred_check_branch
        %210 = sbr.rel (%p208) target = $region16
      $region15: #{mlp_forward.4} parent=11 // pred_region
        _
      $region16: #{mlp_forward.4} parent=11 // pred_fallthru
        _
      // Predicated region
      $region17: #{mlp_forward.4} parent=11 // pred_check
        %p211 = pneg %p95
      $region18: #{mlp_forward.4} parent=11 // pred_check_branch
        %213 = sbr.rel (%p211) target = $region20
      $region19: #{mlp_forward.4} parent=11 // pred_region
        _
      $region20: #{mlp_forward.4} parent=11 // pred_fallthru
        _
      // Predicated region
      $region21: #{mlp_forward.4} parent=11 // pred_check
        %p214 = pneg %p116
      $region22: #{mlp_forward.4} parent=11 // pred_check_branch
        %216 = sbr.rel (%p214) target = $region24
      $region23: #{mlp_forward.4} parent=11 // pred_region
        _
      $region24: #{mlp_forward.4} parent=11 // pred_fallthru
        _
      // Predicated region
      $region25: #{mlp_forward.4} parent=11 // pred_check
        %p217 = pneg %p137
      $region26: #{mlp_forward.4} parent=11 // pred_check_branch
        %219 = sbr.rel (%p217) target = $region28
      $region27: #{mlp_forward.4} parent=11 // pred_region
        _
      $region28: #{mlp_forward.4} parent=11 // pred_fallthru
        _
    $region12: #{mlp_forward.4} parent=5 // pred_fallthru
      _
    %p220 = scmp.lt.s32.totalorder %s13, 2
    // Predicated region
    $region29: #{mlp_forward.4} parent=5 // pred_check
      %p221 = pneg %p220
    $region30: #{mlp_forward.4} parent=5 // pred_check_branch
      %223 = sbr.rel (%p221) target = $region32
    $region31: #{mlp_forward.4} parent=5 // pred_region
      // Predicated region
      $region33: #{mlp_forward.4} parent=31 // pred_check
        %p224 = pneg %p47
      $region34: #{mlp_forward.4} parent=31 // pred_check_branch
        %226 = sbr.rel (%p224) target = $region36
      $region35: #{mlp_forward.4} parent=31 // pred_region
        %s227 = smul.u32 2, %s21
        %p228 = scmp.lt.s32.totalorder %s20, 1
        %s229 = scalar_select %p228, %s20, 1
        %p230 = scmp.lt.s32.totalorder %s227, 1
        %s231 = scalar_select %p230, %s227, 1
        %s232 = smul.addr %s229, 2
        %s233 = sadd.s32 %s231, %s232
        %s234 = smul.addr %s233, 4
        %s235 = scalar_lea.vmem %s0, %s234
        %s236 = smul.u32 2, %s21
      $region36: #{mlp_forward.4} parent=31 // pred_fallthru
        _
    $region32: #{mlp_forward.4} parent=5 // pred_fallthru
      _
    %p237 = scmp.le.s32.totalorder 1, %s13
    %p238 = scmp.lt.s32.totalorder %s13, 3
    %p239 = pnand %p237, %p238
    %p240 = pneg %p239
    // Predicated region
    $region37: #{mlp_forward.4} parent=5 // pred_check
      _
    $region38: #{mlp_forward.4} parent=5 // pred_check_branch
      %242 = sbr.rel (%p239) target = $region40
    $region39: #{mlp_forward.4} parent=5 // pred_region
      %s243 = ssub.s32 %s13, 1
      %s244 = smul.u32 2, %s23
      %p245 = scmp.lt.s32.totalorder %s22, 1
      %s246 = scalar_select %p245, %s22, 1
      %p247 = scmp.lt.s32.totalorder %s244, 1
      %s248 = scalar_select %p247, %s244, 1
      %s249 = smul.addr %s246, 2
      %s250 = sadd.s32 %s248, %s249
      %s251 = smul.addr %s250, 4
      %s252 = scalar_lea.vmem %s0, %s251
      %p253 = pneg %p53
      %p254 = pneg %p50
      %p255 = pneg %p74
      %p256 = pneg %p71
      %p257 = pneg %p95
      %p258 = pneg %p92
      %p259 = pneg %p116
      %p260 = pneg %p113
      %p261 = pneg %p137
      %p262 = pneg %p134
      %p263 = pneg %p165
      %p264 = pneg %p162
      %s265 = smul.u32 2, %s23
      %p266 = scmp.lt.s32.totalorder %s22, 1
      %s267 = scalar_select %p266, %s22, 1
      %p268 = scmp.lt.s32.totalorder %s265, 1
      %s269 = scalar_select %p268, %s265, 1
      %s270 = smul.addr %s267, 2
      %s271 = sadd.s32 %s269, %s270
      %s272 = smul.addr %s271, 2
      %s273 = scalar_lea.vmem %s5, %s272
      %p274 = pneg %p193
      %p275 = pneg %p190
      %p276 = scmp.lt.s32.totalorder %s22, 1
      %s277 = scalar_select %p276, %s22, 1
      %p278 = scmp.lt.s32.totalorder %s23, 0
      %s279 = scalar_select %p278, %s23, 0
      %s280 = smul.addr %s279, 16
      %s281 = smul.addr %s277, 16
      %s282 = sadd.s32 %s280, %s281
      %s283 = smul.addr %s282, 8
      %s284 = scalar_lea.vmem %s6, %s283
      %s285 = smul.u32 2, %s23
      %p286 = scmp.lt.s32.totalorder %s22, 1
      %s287 = scalar_select %p286, %s22, 1
      %p288 = scmp.lt.s32.totalorder %s285, 1
      %s289 = scalar_select %p288, %s285, 1
      %s290 = smul.addr %s287, 2
      %s291 = sadd.s32 %s289, %s290
      %s292 = smul.addr %s291, 4
      %s293 = scalar_lea.vmem %s0, %s292
      %s294 = smul.u32 2, %s23
      %s295 = smul.u32 2, %s23
      %p296 = scmp.lt.s32.totalorder %s22, 1
      %s297 = scalar_select %p296, %s22, 1
      %p298 = scmp.lt.s32.totalorder %s295, 1
      %s299 = scalar_select %p298, %s295, 1
      %s300 = smul.addr %s297, 2
      %s301 = sadd.s32 %s299, %s300
      %s302 = smul.addr %s301, 2
      %s303 = scalar_lea.vmem %s5, %s302
      %s304 = smul.u32 2, %s23
      %p305 = scmp.lt.s32.totalorder %s22, 1
      %s306 = scalar_select %p305, %s22, 1
      %p307 = scmp.lt.s32.totalorder %s23, 0
      %s308 = scalar_select %p307, %s23, 0
      %s309 = smul.addr %s308, 16
      %s310 = smul.addr %s306, 16
      %s311 = sadd.s32 %s309, %s310
      %s312 = smul.addr %s311, 8
      %s313 = scalar_lea.vmem %s6, %s312
      %v315 = vld [vmem:[%s293] sm:$0xff]
      %v317 = vcombine.high %v315, %v315
      %v319 = vpack.c.bf16 %v315, %v315
      %v320 = vpack.c.bf16 %v317, %v317
      %v321 = vld [vmem:[%s1] sm:$0xf]
      %v322 = vld [vmem:[%s1 + $0x4] sm:$0xf]
      %v323 = vld [vmem:[%s1 + $0x8] sm:$0xf]
      %v324 = vld [vmem:[%s1 + $0xc] sm:$0xf]
      %v325 = vld [vmem:[%s1 + $0x10] sm:$0xf]
      %v326 = vld [vmem:[%s1 + $0x14] sm:$0xf]
      %v327 = vld [vmem:[%s1 + $0x18] sm:$0xf]
      %v328 = vld [vmem:[%s1 + $0x1c] sm:$0xf]
      %v329 = vld [vmem:[%s1 + $0x20] sm:$0xf]
      %v330 = vld [vmem:[%s1 + $0x24] sm:$0xf]
      %v331 = vld [vmem:[%s1 + $0x28] sm:$0xf]
      %v332 = vld [vmem:[%s1 + $0x2c] sm:$0xf]
      %v333 = vld [vmem:[%s1 + $0x30] sm:$0xf]
      %v334 = vld [vmem:[%s1 + $0x34] sm:$0xf]
      %v335 = vld [vmem:[%s1 + $0x38] sm:$0xf]
      %v336 = vld [vmem:[%s1 + $0x3c] sm:$0xf]
      %v353 = vunpack.c.l.b16 %v321
      %v354 = vunpack.c.l.b16 %v322
      %v355 = vunpack.c.l.b16 %v323
      %v356 = vunpack.c.l.b16 %v324
      %v357 = vunpack.c.l.b16 %v325
      %v358 = vunpack.c.l.b16 %v326
      %v359 = vunpack.c.l.b16 %v327
      %v360 = vunpack.c.l.b16 %v328
      %v361 = vunpack.c.l.b16 %v329
      %v362 = vunpack.c.l.b16 %v330
      %v363 = vunpack.c.l.b16 %v331
      %v364 = vunpack.c.l.b16 %v332
      %v365 = vunpack.c.l.b16 %v333
      %v366 = vunpack.c.l.b16 %v334
      %v367 = vunpack.c.l.b16 %v335
      %v368 = vunpack.c.l.b16 %v336
      %v369 = vpack.c.b16 %v354, %v353
      %v370 = vpack.c.b16 %v356, %v355
      %v371 = vpack.c.b16 %v358, %v357
      %v372 = vpack.c.b16 %v360, %v359
      %v373 = vpack.c.b16 %v362, %v361
      %v374 = vpack.c.b16 %v364, %v363
      %v375 = vpack.c.b16 %v366, %v365
      %v376 = vpack.c.b16 %v368, %v367
      %vm377 = vcmask 31744
      %v379 = vsel %vm377, %v369, 0
      %v382 = vsel %vm377, %v370, 0
      %v385 = vsel %vm377, %v371, 0
      %v388 = vsel %vm377, %v372, 0
      %v391 = vsel %vm377, %v373, 0
      %v394 = vsel %vm377, %v374, 0
      %v397 = vsel %vm377, %v375, 0
      %v400 = vsel %vm377, %v376, 0
      %vm402 = vcmask 1041408
      %v404 = vsel %vm402, %v319, 0
      %v407 = vsel %vm402, %v320, 0
      %409 = vmatprep.subr.bf16.mxu0 %v407
      %410 = vmatpush1.bf16.msra.mxu0 %v404
      %411 = vmatprep.subr.bf16.mxu0 0
      %412 = vmatpush1.bf16.msra.mxu0 0
      %413 = vmatprep.subr.bf16.mxu0 0
      %414 = vmatpush1.bf16.msra.mxu0 0
      %415 = vmatprep.subr.bf16.mxu0 0
      %416 = vmatpush1.bf16.msra.mxu0 0
      %417 = vmatprep.subr.bf16.mxu0 0
      %418 = vmatpush1.bf16.msra.mxu0 0
      %419 = vmatprep.subr.bf16.mxu0 0
      %420 = vmatpush1.bf16.msra.mxu0 0
      %421 = vmatprep.subr.bf16.mxu0 0
      %422 = vmatpush1.bf16.msra.mxu0 0
      %423 = vmatprep.subr.bf16.mxu0 0
      %424 = vmatpush1.bf16.msra.mxu0 0
      %425 = vmatprep.subr.bf16.mxu0 0
      %426 = vmatpush1.bf16.msra.mxu0 0
      %427 = vmatprep.subr.bf16.mxu0 0
      %428 = vmatpush1.bf16.msra.mxu0 0
      %429 = vmatprep.subr.bf16.mxu0 0
      %430 = vmatpush1.bf16.msra.mxu0 0
      %431 = vmatprep.subr.bf16.mxu0 0
      %432 = vmatpush1.bf16.msra.mxu0 0
      %433 = vmatprep.subr.bf16.mxu0 0
      %434 = vmatpush1.bf16.msra.mxu0 0
      %435 = vmatprep.subr.bf16.mxu0 0
      %436 = vmatpush1.bf16.msra.mxu0 0
      %437 = vmatprep.subr.bf16.mxu0 0
      %438 = vmatpush1.bf16.msra.mxu0 0
      %439 = vmatprep.subr.bf16.mxu0 0
      %440 = vmatpush1.bf16.msra.mxu0 0
      %441 = vmatprep.mubr.bf16.mxu0 0
      %442 = vmatmul.mubr.bf16.gmra.mrb[0].mxu0 %v379
      %v443 = vpop.f32.mrb[0].mxu0
      %v444 = vadd.f32 0.0, %v443
      %v445 = vpop.f32.mrb[0].mxu0
      %v446 = vadd.f32 0.0, %v445
      %v447 = vpop.f32.mrb[0].mxu0
      %v448 = vadd.f32 0.0, %v447
      %v449 = vpop.f32.mrb[0].mxu0
      %v450 = vadd.f32 0.0, %v449
      %451 = vmatprep.mubr.bf16.mxu0 0
      %452 = vmatmul.mubr.bf16.gmra.mrb[0].mxu0 %v382
      %v453 = vpop.f32.mrb[0].mxu0
      %v454 = vadd.f32 0.0, %v453
      %v455 = vpop.f32.mrb[0].mxu0
      %v456 = vadd.f32 0.0, %v455
      %v457 = vpop.f32.mrb[0].mxu0
      %v458 = vadd.f32 0.0, %v457
      %v459 = vpop.f32.mrb[0].mxu0
      %v460 = vadd.f32 0.0, %v459
      %461 = vmatprep.mubr.bf16.mxu0 0
      %462 = vmatmul.mubr.bf16.gmra.mrb[0].mxu0 %v385
      %v463 = vpop.f32.mrb[0].mxu0
      %v464 = vadd.f32 0.0, %v463
      %v465 = vpop.f32.mrb[0].mxu0
      %v466 = vadd.f32 0.0, %v465
      %v467 = vpop.f32.mrb[0].mxu0
      %v468 = vadd.f32 0.0, %v467
      %v469 = vpop.f32.mrb[0].mxu0
      %v470 = vadd.f32 0.0, %v469
      %471 = vmatprep.mubr.bf16.mxu0 0
      %472 = vmatmul.mubr.bf16.gmra.mrb[0].mxu0 %v388
      %v473 = vpop.f32.mrb[0].mxu0
      %v474 = vadd.f32 0.0, %v473
      %v475 = vpop.f32.mrb[0].mxu0
      %v476 = vadd.f32 0.0, %v475
      %v477 = vpop.f32.mrb[0].mxu0
      %v478 = vadd.f32 0.0, %v477
      %v479 = vpop.f32.mrb[0].mxu0
      %v480 = vadd.f32 0.0, %v479
      %481 = vmatprep.mubr.bf16.mxu0 0
      %482 = vmatmul.mubr.bf16.gmra.mrb[0].mxu0 %v391
      %v483 = vpop.f32.mrb[0].mxu0
      %v484 = vadd.f32 0.0, %v483
      %v485 = vpop.f32.mrb[0].mxu0
      %v486 = vadd.f32 0.0, %v485
      %v487 = vpop.f32.mrb[0].mxu0
      %v488 = vadd.f32 0.0, %v487
      %v489 = vpop.f32.mrb[0].mxu0
      %v490 = vadd.f32 0.0, %v489
      %491 = vmatprep.mubr.bf16.mxu0 0
      %492 = vmatmul.mubr.bf16.gmra.mrb[0].mxu0 %v394
      %v493 = vpop.f32.mrb[0].mxu0
      %v494 = vadd.f32 0.0, %v493
      %v495 = vpop.f32.mrb[0].mxu0
      %v496 = vadd.f32 0.0, %v495
      %v497 = vpop.f32.mrb[0].mxu0
      %v498 = vadd.f32 0.0, %v497
      %v499 = vpop.f32.mrb[0].mxu0
      %v500 = vadd.f32 0.0, %v499
      %501 = vmatprep.mubr.bf16.mxu0 0
      %502 = vmatmul.mubr.bf16.gmra.mrb[0].mxu0 %v397
      %v503 = vpop.f32.mrb[0].mxu0
      %v504 = vadd.f32 0.0, %v503
      %v505 = vpop.f32.mrb[0].mxu0
      %v506 = vadd.f32 0.0, %v505
      %v507 = vpop.f32.mrb[0].mxu0
      %v508 = vadd.f32 0.0, %v507
      %v509 = vpop.f32.mrb[0].mxu0
      %v510 = vadd.f32 0.0, %v509
      %511 = vmatprep.mubr.bf16.mxu0 0
      %512 = vmatmul.mubr.bf16.gmra.mrb[0].mxu0 %v400
      %v513 = vpop.f32.mrb[0].mxu0
      %v514 = vadd.f32 0.0, %v513
      %v515 = vpop.f32.mrb[0].mxu0
      %v516 = vadd.f32 0.0, %v515
      %v517 = vpop.f32.mrb[0].mxu0
      %v518 = vadd.f32 0.0, %v517
      %v519 = vpop.f32.mrb[0].mxu0
      %v520 = vadd.f32 0.0, %v519
      %521 = vdwg.mxu0
      %v522 = vld [vmem:[%s3] sm:$0xff]
      %v523 = vld [vmem:[%s3 + $0x8] sm:$0xff]
      %v524 = vld [vmem:[%s3 + $0x10] sm:$0xff]
      %v525 = vld [vmem:[%s3 + $0x18] sm:$0xff]
      %v526 = vld [vmem:[%s3 + $0x20] sm:$0xff]
      %v527 = vld [vmem:[%s3 + $0x28] sm:$0xff]
      %v528 = vld [vmem:[%s3 + $0x30] sm:$0xff]
      %v529 = vld [vmem:[%s3 + $0x38] sm:$0xff]
      %v530 = vld [vmem:[%s3 + $0x40] sm:$0xff]
      %v531 = vld [vmem:[%s3 + $0x48] sm:$0xff]
      %v532 = vld [vmem:[%s3 + $0x50] sm:$0xff]
      %v533 = vld [vmem:[%s3 + $0x58] sm:$0xff]
      %v534 = vld [vmem:[%s3 + $0x60] sm:$0xff]
      %v535 = vld [vmem:[%s3 + $0x68] sm:$0xff]
      %v536 = vld [vmem:[%s3 + $0x70] sm:$0xff]
      %v537 = vld [vmem:[%s3 + $0x78] sm:$0xff]
      %539 = vset.pattern.permute.xlu0 0
      %540 = vperm.xlu0 %539, %v522
      %v541 = vpop.permute.xlu0 %540
      %544 = vset.pattern.permute.xlu0 0
      %545 = vperm.xlu0 %544, %v523
      %v546 = vpop.permute.xlu0 %545
      %549 = vset.pattern.permute.xlu0 0
      %550 = vperm.xlu0 %549, %v524
      %v551 = vpop.permute.xlu0 %550
      %554 = vset.pattern.permute.xlu0 0
      %555 = vperm.xlu0 %554, %v525
      %v556 = vpop.permute.xlu0 %555
      %559 = vset.pattern.permute.xlu0 0
      %560 = vperm.xlu0 %559, %v526
      %v561 = vpop.permute.xlu0 %560
      %564 = vset.pattern.permute.xlu0 0
      %565 = vperm.xlu0 %564, %v527
      %v566 = vpop.permute.xlu0 %565
      %569 = vset.pattern.permute.xlu0 0
      %570 = vperm.xlu0 %569, %v528
      %v571 = vpop.permute.xlu0 %570
      %574 = vset.pattern.permute.xlu0 0
      %575 = vperm.xlu0 %574, %v529
      %v576 = vpop.permute.xlu0 %575
      %579 = vset.pattern.permute.xlu0 0
      %580 = vperm.xlu0 %579, %v530
      %v581 = vpop.permute.xlu0 %580
      %584 = vset.pattern.permute.xlu0 0
      %585 = vperm.xlu0 %584, %v531
      %v586 = vpop.permute.xlu0 %585
      %589 = vset.pattern.permute.xlu0 0
      %590 = vperm.xlu0 %589, %v532
      %v591 = vpop.permute.xlu0 %590
      %594 = vset.pattern.permute.xlu0 0
      %595 = vperm.xlu0 %594, %v533
      %v596 = vpop.permute.xlu0 %595
      %599 = vset.pattern.permute.xlu0 0
      %600 = vperm.xlu0 %599, %v534
      %v601 = vpop.permute.xlu0 %600
      %604 = vset.pattern.permute.xlu0 0
      %605 = vperm.xlu0 %604, %v535
      %v606 = vpop.permute.xlu0 %605
      %609 = vset.pattern.permute.xlu0 0
      %610 = vperm.xlu0 %609, %v536
      %v611 = vpop.permute.xlu0 %610
      %614 = vset.pattern.permute.xlu0 0
      %615 = vperm.xlu0 %614, %v537
      %v616 = vpop.permute.xlu0 %615
      %v618 = vmul.f32 %v541, %v444
      %v619 = vmul.f32 %v541, %v446
      %v620 = vmul.f32 %v546, %v448
      %v621 = vmul.f32 %v546, %v450
      %v622 = vmul.f32 %v551, %v454
      %v623 = vmul.f32 %v551, %v456
      %v624 = vmul.f32 %v556, %v458
      %v625 = vmul.f32 %v556, %v460
      %v626 = vmul.f32 %v561, %v464
      %v627 = vmul.f32 %v561, %v466
      %v628 = vmul.f32 %v566, %v468
      %v629 = vmul.f32 %v566, %v470
      %v630 = vmul.f32 %v571, %v474
      %v631 = vmul.f32 %v571, %v476
      %v632 = vmul.f32 %v576, %v478
      %v633 = vmul.f32 %v576, %v480
      %v634 = vmul.f32 %v581, %v484
      %v635 = vmul.f32 %v581, %v486
      %v636 = vmul.f32 %v586, %v488
      %v637 = vmul.f32 %v586, %v490
      %v638 = vmul.f32 %v591, %v494
      %v639 = vmul.f32 %v591, %v496
      %v640 = vmul.f32 %v596, %v498
      %v641 = vmul.f32 %v596, %v500
      %v642 = vmul.f32 %v601, %v504
      %v643 = vmul.f32 %v601, %v506
      %v644 = vmul.f32 %v606, %v508
      %v645 = vmul.f32 %v606, %v510
      %v646 = vmul.f32 %v611, %v514
      %v647 = vmul.f32 %v611, %v516
      %v648 = vmul.f32 %v616, %v518
      %v649 = vmul.f32 %v616, %v520
      %v650 = vld [vmem:[%s4] sm:$0xff]
      %v651 = vld [vmem:[%s4 + $0x8] sm:$0xff]
      %v652 = vld [vmem:[%s4 + $0x10] sm:$0xff]
      %v653 = vld [vmem:[%s4 + $0x18] sm:$0xff]
      %v654 = vld [vmem:[%s4 + $0x20] sm:$0xff]
      %v655 = vld [vmem:[%s4 + $0x28] sm:$0xff]
      %v656 = vld [vmem:[%s4 + $0x30] sm:$0xff]
      %v657 = vld [vmem:[%s4 + $0x38] sm:$0xff]
      %v658 = vld [vmem:[%s4 + $0x40] sm:$0xff]
      %v659 = vld [vmem:[%s4 + $0x48] sm:$0xff]
      %v660 = vld [vmem:[%s4 + $0x50] sm:$0xff]
      %v661 = vld [vmem:[%s4 + $0x58] sm:$0xff]
      %v662 = vld [vmem:[%s4 + $0x60] sm:$0xff]
      %v663 = vld [vmem:[%s4 + $0x68] sm:$0xff]
      %v664 = vld [vmem:[%s4 + $0x70] sm:$0xff]
      %v665 = vld [vmem:[%s4 + $0x78] sm:$0xff]
      %667 = vset.pattern.permute.xlu0 0
      %668 = vperm.xlu0 %667, %v650
      %v669 = vpop.permute.xlu0 %668
      %672 = vset.pattern.permute.xlu0 0
      %673 = vperm.xlu0 %672, %v651
      %v674 = vpop.permute.xlu0 %673
      %677 = vset.pattern.permute.xlu0 0
      %678 = vperm.xlu0 %677, %v652
      %v679 = vpop.permute.xlu0 %678
      %682 = vset.pattern.permute.xlu0 0
      %683 = vperm.xlu0 %682, %v653
      %v684 = vpop.permute.xlu0 %683
      %687 = vset.pattern.permute.xlu0 0
      %688 = vperm.xlu0 %687, %v654
      %v689 = vpop.permute.xlu0 %688
      %692 = vset.pattern.permute.xlu0 0
      %693 = vperm.xlu0 %692, %v655
      %v694 = vpop.permute.xlu0 %693
      %697 = vset.pattern.permute.xlu0 0
      %698 = vperm.xlu0 %697, %v656
      %v699 = vpop.permute.xlu0 %698
      %702 = vset.pattern.permute.xlu0 0
      %703 = vperm.xlu0 %702, %v657
      %v704 = vpop.permute.xlu0 %703
      %707 = vset.pattern.permute.xlu0 0
      %708 = vperm.xlu0 %707, %v658
      %v709 = vpop.permute.xlu0 %708
      %712 = vset.pattern.permute.xlu0 0
      %713 = vperm.xlu0 %712, %v659
      %v714 = vpop.permute.xlu0 %713
      %717 = vset.pattern.permute.xlu0 0
      %718 = vperm.xlu0 %717, %v660
      %v719 = vpop.permute.xlu0 %718
      %722 = vset.pattern.permute.xlu0 0
      %723 = vperm.xlu0 %722, %v661
      %v724 = vpop.permute.xlu0 %723
      %727 = vset.pattern.permute.xlu0 0
      %728 = vperm.xlu0 %727, %v662
      %v729 = vpop.permute.xlu0 %728
      %732 = vset.pattern.permute.xlu0 0
      %733 = vperm.xlu0 %732, %v663
      %v734 = vpop.permute.xlu0 %733
      %737 = vset.pattern.permute.xlu0 0
      %738 = vperm.xlu0 %737, %v664
      %v739 = vpop.permute.xlu0 %738
      %742 = vset.pattern.permute.xlu0 0
      %743 = vperm.xlu0 %742, %v665
      %v744 = vpop.permute.xlu0 %743
      %v746 = vadd.f32 %v618, %v669
      %v747 = vadd.f32 %v619, %v669
      %v748 = vadd.f32 %v620, %v674
      %v749 = vadd.f32 %v621, %v674
      %v750 = vadd.f32 %v622, %v679
      %v751 = vadd.f32 %v623, %v679
      %v752 = vadd.f32 %v624, %v684
      %v753 = vadd.f32 %v625, %v684
      %v754 = vadd.f32 %v626, %v689
      %v755 = vadd.f32 %v627, %v689
      %v756 = vadd.f32 %v628, %v694
      %v757 = vadd.f32 %v629, %v694
      %v758 = vadd.f32 %v630, %v699
      %v759 = vadd.f32 %v631, %v699
      %v760 = vadd.f32 %v632, %v704
      %v761 = vadd.f32 %v633, %v704
      %v762 = vadd.f32 %v634, %v709
      %v763 = vadd.f32 %v635, %v709
      %v764 = vadd.f32 %v636, %v714
      %v765 = vadd.f32 %v637, %v714
      %v766 = vadd.f32 %v638, %v719
      %v767 = vadd.f32 %v639, %v719
      %v768 = vadd.f32 %v640, %v724
      %v769 = vadd.f32 %v641, %v724
      %v770 = vadd.f32 %v642, %v729
      %v771 = vadd.f32 %v643, %v729
      %v772 = vadd.f32 %v644, %v734
      %v773 = vadd.f32 %v645, %v734
      %v774 = vadd.f32 %v646, %v739
      %v775 = vadd.f32 %v647, %v739
      %v776 = vadd.f32 %v648, %v744
      %v777 = vadd.f32 %v649, %v744
      %v778 = vmul.f32 %v746, 0.5
      %v779 = vmul.f32 %v747, 0.5
      %v780 = vmul.f32 %v748, 0.5
      %v781 = vmul.f32 %v749, 0.5
      %v782 = vmul.f32 %v750, 0.5
      %v783 = vmul.f32 %v751, 0.5
      %v784 = vmul.f32 %v752, 0.5
      %v785 = vmul.f32 %v753, 0.5
      %v786 = vmul.f32 %v754, 0.5
      %v787 = vmul.f32 %v755, 0.5
      %v788 = vmul.f32 %v756, 0.5
      %v789 = vmul.f32 %v757, 0.5
      %v790 = vmul.f32 %v758, 0.5
      %v791 = vmul.f32 %v759, 0.5
      %v792 = vmul.f32 %v760, 0.5
      %v793 = vmul.f32 %v761, 0.5
      %v794 = vmul.f32 %v762, 0.5
      %v795 = vmul.f32 %v763, 0.5
      %v796 = vmul.f32 %v764, 0.5
      %v797 = vmul.f32 %v765, 0.5
      %v798 = vmul.f32 %v766, 0.5
      %v799 = vmul.f32 %v767, 0.5
      %v800 = vmul.f32 %v768, 0.5
      %v801 = vmul.f32 %v769, 0.5
      %v802 = vmul.f32 %v770, 0.5
      %v803 = vmul.f32 %v771, 0.5
      %v804 = vmul.f32 %v772, 0.5
      %v805 = vmul.f32 %v773, 0.5
      %v806 = vmul.f32 %v774, 0.5
      %v807 = vmul.f32 %v775, 0.5
      %v808 = vmul.f32 %v776, 0.5
      %v809 = vmul.f32 %v777, 0.5
      %v810 = vmul.f32 %v746, 0.044715
      %v811 = vmul.f32 %v747, 0.044715
      %v812 = vmul.f32 %v748, 0.044715
      %v813 = vmul.f32 %v749, 0.044715
      %v814 = vmul.f32 %v750, 0.044715
      %v815 = vmul.f32 %v751, 0.044715
      %v816 = vmul.f32 %v752, 0.044715
      %v817 = vmul.f32 %v753, 0.044715
      %v818 = vmul.f32 %v754, 0.044715
      %v819 = vmul.f32 %v755, 0.044715
      %v820 = vmul.f32 %v756, 0.044715
      %v821 = vmul.f32 %v757, 0.044715
      %v822 = vmul.f32 %v758, 0.044715
      %v823 = vmul.f32 %v759, 0.044715
      %v824 = vmul.f32 %v760, 0.044715
      %v825 = vmul.f32 %v761, 0.044715
      %v826 = vmul.f32 %v762, 0.044715
      %v827 = vmul.f32 %v763, 0.044715
      %v828 = vmul.f32 %v764, 0.044715
      %v829 = vmul.f32 %v765, 0.044715
      %v830 = vmul.f32 %v766, 0.044715
      %v831 = vmul.f32 %v767, 0.044715
      %v832 = vmul.f32 %v768, 0.044715
      %v833 = vmul.f32 %v769, 0.044715
      %v834 = vmul.f32 %v770, 0.044715
      %v835 = vmul.f32 %v771, 0.044715
      %v836 = vmul.f32 %v772, 0.044715
      %v837 = vmul.f32 %v773, 0.044715
      %v838 = vmul.f32 %v774, 0.044715
      %v839 = vmul.f32 %v775, 0.044715
      %v840 = vmul.f32 %v776, 0.044715
      %v841 = vmul.f32 %v777, 0.044715
      %v842 = vmul.f32 %v810, %v746
      %v843 = vmul.f32 %v811, %v747
      %v844 = vmul.f32 %v812, %v748
      %v845 = vmul.f32 %v813, %v749
      %v846 = vmul.f32 %v814, %v750
      %v847 = vmul.f32 %v815, %v751
      %v848 = vmul.f32 %v816, %v752
      %v849 = vmul.f32 %v817, %v753
      %v850 = vmul.f32 %v818, %v754
      %v851 = vmul.f32 %v819, %v755
      %v852 = vmul.f32 %v820, %v756
      %v853 = vmul.f32 %v821, %v757
      %v854 = vmul.f32 %v822, %v758
      %v855 = vmul.f32 %v823, %v759
      %v856 = vmul.f32 %v824, %v760
      %v857 = vmul.f32 %v825, %v761
      %v858 = vmul.f32 %v826, %v762
      %v859 = vmul.f32 %v827, %v763
      %v860 = vmul.f32 %v828, %v764
      %v861 = vmul.f32 %v829, %v765
      %v862 = vmul.f32 %v830, %v766
      %v863 = vmul.f32 %v831, %v767
      %v864 = vmul.f32 %v832, %v768
      %v865 = vmul.f32 %v833, %v769
      %v866 = vmul.f32 %v834, %v770
      %v867 = vmul.f32 %v835, %v771
      %v868 = vmul.f32 %v836, %v772
      %v869 = vmul.f32 %v837, %v773
      %v870 = vmul.f32 %v838, %v774
      %v871 = vmul.f32 %v839, %v775
      %v872 = vmul.f32 %v840, %v776
      %v873 = vmul.f32 %v841, %v777
      %v874 = vmul.f32 %v842, %v746
      %v875 = vmul.f32 %v843, %v747
      %v876 = vmul.f32 %v844, %v748
      %v877 = vmul.f32 %v845, %v749
      %v878 = vmul.f32 %v846, %v750
      %v879 = vmul.f32 %v847, %v751
      %v880 = vmul.f32 %v848, %v752
      %v881 = vmul.f32 %v849, %v753
      %v882 = vmul.f32 %v850, %v754
      %v883 = vmul.f32 %v851, %v755
      %v884 = vmul.f32 %v852, %v756
      %v885 = vmul.f32 %v853, %v757
      %v886 = vmul.f32 %v854, %v758
      %v887 = vmul.f32 %v855, %v759
      %v888 = vmul.f32 %v856, %v760
      %v889 = vmul.f32 %v857, %v761
      %v890 = vmul.f32 %v858, %v762
      %v891 = vmul.f32 %v859, %v763
      %v892 = vmul.f32 %v860, %v764
      %v893 = vmul.f32 %v861, %v765
      %v894 = vmul.f32 %v862, %v766
      %v895 = vmul.f32 %v863, %v767
      %v896 = vmul.f32 %v864, %v768
      %v897 = vmul.f32 %v865, %v769
      %v898 = vmul.f32 %v866, %v770
      %v899 = vmul.f32 %v867, %v771
      %v900 = vmul.f32 %v868, %v772
      %v901 = vmul.f32 %v869, %v773
      %v902 = vmul.f32 %v870, %v774
      %v903 = vmul.f32 %v871, %v775
      %v904 = vmul.f32 %v872, %v776
      %v905 = vmul.f32 %v873, %v777
      %v906 = vadd.f32 %v746, %v874
      %v907 = vadd.f32 %v747, %v875
      %v908 = vadd.f32 %v748, %v876
      %v909 = vadd.f32 %v749, %v877
      %v910 = vadd.f32 %v750, %v878
      %v911 = vadd.f32 %v751, %v879
      %v912 = vadd.f32 %v752, %v880
      %v913 = vadd.f32 %v753, %v881
      %v914 = vadd.f32 %v754, %v882
      %v915 = vadd.f32 %v755, %v883
      %v916 = vadd.f32 %v756, %v884
      %v917 = vadd.f32 %v757, %v885
      %v918 = vadd.f32 %v758, %v886
      %v919 = vadd.f32 %v759, %v887
      %v920 = vadd.f32 %v760, %v888
      %v921 = vadd.f32 %v761, %v889
      %v922 = vadd.f32 %v762, %v890
      %v923 = vadd.f32 %v763, %v891
      %v924 = vadd.f32 %v764, %v892
      %v925 = vadd.f32 %v765, %v893
      %v926 = vadd.f32 %v766, %v894
      %v927 = vadd.f32 %v767, %v895
      %v928 = vadd.f32 %v768, %v896
      %v929 = vadd.f32 %v769, %v897
      %v930 = vadd.f32 %v770, %v898
      %v931 = vadd.f32 %v771, %v899
      %v932 = vadd.f32 %v772, %v900
      %v933 = vadd.f32 %v773, %v901
      %v934 = vadd.f32 %v774, %v902
      %v935 = vadd.f32 %v775, %v903
      %v936 = vadd.f32 %v776, %v904
      %v937 = vadd.f32 %v777, %v905
      %v938 = vmul.f32 %v906, 0.7978846
      %v939 = vmul.f32 %v907, 0.7978846
      %v940 = vmul.f32 %v908, 0.7978846
      %v941 = vmul.f32 %v909, 0.7978846
      %v942 = vmul.f32 %v910, 0.7978846
      %v943 = vmul.f32 %v911, 0.7978846
      %v944 = vmul.f32 %v912, 0.7978846
      %v945 = vmul.f32 %v913, 0.7978846
      %v946 = vmul.f32 %v914, 0.7978846
      %v947 = vmul.f32 %v915, 0.7978846
      %v948 = vmul.f32 %v916, 0.7978846
      %v949 = vmul.f32 %v917, 0.7978846
      %v950 = vmul.f32 %v918, 0.7978846
      %v951 = vmul.f32 %v919, 0.7978846
      %v952 = vmul.f32 %v920, 0.7978846
      %v953 = vmul.f32 %v921, 0.7978846
      %v954 = vmul.f32 %v922, 0.7978846
      %v955 = vmul.f32 %v923, 0.7978846
      %v956 = vmul.f32 %v924, 0.7978846
      %v957 = vmul.f32 %v925, 0.7978846
      %v958 = vmul.f32 %v926, 0.7978846
      %v959 = vmul.f32 %v927, 0.7978846
      %v960 = vmul.f32 %v928, 0.7978846
      %v961 = vmul.f32 %v929, 0.7978846
      %v962 = vmul.f32 %v930, 0.7978846
      %v963 = vmul.f32 %v931, 0.7978846
      %v964 = vmul.f32 %v932, 0.7978846
      %v965 = vmul.f32 %v933, 0.7978846
      %v966 = vmul.f32 %v934, 0.7978846
      %v967 = vmul.f32 %v935, 0.7978846
      %v968 = vmul.f32 %v936, 0.7978846
      %v969 = vmul.f32 %v937, 0.7978846
      %v970 = vtanh.pop %v938
      %v971 = vtanh.pop %v939
      %v972 = vtanh.pop %v940
      %v973 = vtanh.pop %v941
      %v974 = vtanh.pop %v942
      %v975 = vtanh.pop %v943
      %v976 = vtanh.pop %v944
      %v977 = vtanh.pop %v945
      %v978 = vtanh.pop %v946
      %v979 = vtanh.pop %v947
      %v980 = vtanh.pop %v948
      %v981 = vtanh.pop %v949
      %v982 = vtanh.pop %v950
      %v983 = vtanh.pop %v951
      %v984 = vtanh.pop %v952
      %v985 = vtanh.pop %v953
      %v986 = vtanh.pop %v954
      %v987 = vtanh.pop %v955
      %v988 = vtanh.pop %v956
      %v989 = vtanh.pop %v957
      %v990 = vtanh.pop %v958
      %v991 = vtanh.pop %v959
      %v992 = vtanh.pop %v960
      %v993 = vtanh.pop %v961
      %v994 = vtanh.pop %v962
      %v995 = vtanh.pop %v963
      %v996 = vtanh.pop %v964
      %v997 = vtanh.pop %v965
      %v998 = vtanh.pop %v966
      %v999 = vtanh.pop %v967
      %v1000 = vtanh.pop %v968
      %v1001 = vtanh.pop %v969
      %v1002 = vadd.f32 %v970, 1.0
      %v1003 = vadd.f32 %v971, 1.0
      %v1004 = vadd.f32 %v972, 1.0
      %v1005 = vadd.f32 %v973, 1.0
      %v1006 = vadd.f32 %v974, 1.0
      %v1007 = vadd.f32 %v975, 1.0
      %v1008 = vadd.f32 %v976, 1.0
      %v1009 = vadd.f32 %v977, 1.0
      %v1010 = vadd.f32 %v978, 1.0
      %v1011 = vadd.f32 %v979, 1.0
      %v1012 = vadd.f32 %v980, 1.0
      %v1013 = vadd.f32 %v981, 1.0
      %v1014 = vadd.f32 %v982, 1.0
      %v1015 = vadd.f32 %v983, 1.0
      %v1016 = vadd.f32 %v984, 1.0
      %v1017 = vadd.f32 %v985, 1.0
      %v1018 = vadd.f32 %v986, 1.0
      %v1019 = vadd.f32 %v987, 1.0
      %v1020 = vadd.f32 %v988, 1.0
      %v1021 = vadd.f32 %v989, 1.0
      %v1022 = vadd.f32 %v990, 1.0
      %v1023 = vadd.f32 %v991, 1.0
      %v1024 = vadd.f32 %v992, 1.0
      %v1025 = vadd.f32 %v993, 1.0
      %v1026 = vadd.f32 %v994, 1.0
      %v1027 = vadd.f32 %v995, 1.0
      %v1028 = vadd.f32 %v996, 1.0
      %v1029 = vadd.f32 %v997, 1.0
      %v1030 = vadd.f32 %v998, 1.0
      %v1031 = vadd.f32 %v999, 1.0
      %v1032 = vadd.f32 %v1000, 1.0
      %v1033 = vadd.f32 %v1001, 1.0
      %v1034 = vmul.f32 %v778, %v1002
      %v1035 = vmul.f32 %v779, %v1003
      %v1036 = vmul.f32 %v780, %v1004
      %v1037 = vmul.f32 %v781, %v1005
      %v1038 = vmul.f32 %v782, %v1006
      %v1039 = vmul.f32 %v783, %v1007
      %v1040 = vmul.f32 %v784, %v1008
      %v1041 = vmul.f32 %v785, %v1009
      %v1042 = vmul.f32 %v786, %v1010
      %v1043 = vmul.f32 %v787, %v1011
      %v1044 = vmul.f32 %v788, %v1012
      %v1045 = vmul.f32 %v789, %v1013
      %v1046 = vmul.f32 %v790, %v1014
      %v1047 = vmul.f32 %v791, %v1015
      %v1048 = vmul.f32 %v792, %v1016
      %v1049 = vmul.f32 %v793, %v1017
      %v1050 = vmul.f32 %v794, %v1018
      %v1051 = vmul.f32 %v795, %v1019
      %v1052 = vmul.f32 %v796, %v1020
      %v1053 = vmul.f32 %v797, %v1021
      %v1054 = vmul.f32 %v798, %v1022
      %v1055 = vmul.f32 %v799, %v1023
      %v1056 = vmul.f32 %v800, %v1024
      %v1057 = vmul.f32 %v801, %v1025
      %v1058 = vmul.f32 %v802, %v1026
      %v1059 = vmul.f32 %v803, %v1027
      %v1060 = vmul.f32 %v804, %v1028
      %v1061 = vmul.f32 %v805, %v1029
      %v1062 = vmul.f32 %v806, %v1030
      %v1063 = vmul.f32 %v807, %v1031
      %v1064 = vmul.f32 %v808, %v1032
      %v1065 = vmul.f32 %v809, %v1033
      %v1066 = vld [vmem:[%s2] sm:$0xf]
      %v1067 = vld [vmem:[%s2 + $0x4] sm:$0xf]
      %v1068 = vld [vmem:[%s2 + $0x8] sm:$0xf]
      %v1069 = vld [vmem:[%s2 + $0xc] sm:$0xf]
      %v1070 = vld [vmem:[%s2 + $0x10] sm:$0xf]
      %v1071 = vld [vmem:[%s2 + $0x14] sm:$0xf]
      %v1072 = vld [vmem:[%s2 + $0x18] sm:$0xf]
      %v1073 = vld [vmem:[%s2 + $0x1c] sm:$0xf]
      %v1074 = vld [vmem:[%s2 + $0x20] sm:$0xf]
      %v1075 = vld [vmem:[%s2 + $0x24] sm:$0xf]
      %v1076 = vld [vmem:[%s2 + $0x28] sm:$0xf]
      %v1077 = vld [vmem:[%s2 + $0x2c] sm:$0xf]
      %v1078 = vld [vmem:[%s2 + $0x30] sm:$0xf]
      %v1079 = vld [vmem:[%s2 + $0x34] sm:$0xf]
      %v1080 = vld [vmem:[%s2 + $0x38] sm:$0xf]
      %v1081 = vld [vmem:[%s2 + $0x3c] sm:$0xf]
      %v1082 = vpack.c.bf16 %v1036, %v1034
      %v1083 = vpack.c.bf16 %v1037, %v1035
      %v1084 = vpack.c.bf16 %v1040, %v1038
      %v1085 = vpack.c.bf16 %v1041, %v1039
      %v1086 = vpack.c.bf16 %v1044, %v1042
      %v1087 = vpack.c.bf16 %v1045, %v1043
      %v1088 = vpack.c.bf16 %v1048, %v1046
      %v1089 = vpack.c.bf16 %v1049, %v1047
      %v1090 = vpack.c.bf16 %v1052, %v1050
      %v1091 = vpack.c.bf16 %v1053, %v1051
      %v1092 = vpack.c.bf16 %v1056, %v1054
      %v1093 = vpack.c.bf16 %v1057, %v1055
      %v1094 = vpack.c.bf16 %v1060, %v1058
      %v1095 = vpack.c.bf16 %v1061, %v1059
      %v1096 = vpack.c.bf16 %v1064, %v1062
      %v1097 = vpack.c.bf16 %v1065, %v1063
      %v1114 = vunpack.c.l.b16 %v1066
      %v1115 = vunpack.c.l.b16 %v1067
      %v1116 = vunpack.c.l.b16 %v1068
      %v1117 = vunpack.c.l.b16 %v1069
      %v1118 = vunpack.c.l.b16 %v1070
      %v1119 = vunpack.c.l.b16 %v1071
      %v1120 = vunpack.c.l.b16 %v1072
      %v1121 = vunpack.c.l.b16 %v1073
      %v1122 = vunpack.c.l.b16 %v1074
      %v1123 = vunpack.c.l.b16 %v1075
      %v1124 = vunpack.c.l.b16 %v1076
      %v1125 = vunpack.c.l.b16 %v1077
      %v1126 = vunpack.c.l.b16 %v1078
      %v1127 = vunpack.c.l.b16 %v1079
      %v1128 = vunpack.c.l.b16 %v1080
      %v1129 = vunpack.c.l.b16 %v1081
      %v1130 = vpack.c.b16 %v1115, %v1114
      %v1131 = vpack.c.b16 %v1117, %v1116
      %v1132 = vpack.c.b16 %v1119, %v1118
      %v1133 = vpack.c.b16 %v1121, %v1120
      %v1134 = vpack.c.b16 %v1123, %v1122
      %v1135 = vpack.c.b16 %v1125, %v1124
      %v1136 = vpack.c.b16 %v1127, %v1126
      %v1137 = vpack.c.b16 %v1129, %v1128
      %1146 = vmatprep.subr.bf16.mxu0 %v1083
      %1147 = vmatpush1.bf16.msra.mxu0 %v1082
      %1148 = vmatprep.subr.bf16.mxu0 %v1085
      %1149 = vmatpush1.bf16.msra.mxu0 %v1084
      %1150 = vmatprep.subr.bf16.mxu0 %v1087
      %1151 = vmatpush1.bf16.msra.mxu0 %v1086
      %1152 = vmatprep.subr.bf16.mxu0 %v1089
      %1153 = vmatpush1.bf16.msra.mxu0 %v1088
      %1154 = vmatprep.subr.bf16.mxu0 %v1091
      %1155 = vmatpush1.bf16.msra.mxu0 %v1090
      %1156 = vmatprep.subr.bf16.mxu0 %v1093
      %1157 = vmatpush1.bf16.msra.mxu0 %v1092
      %1158 = vmatprep.subr.bf16.mxu0 %v1095
      %1159 = vmatpush1.bf16.msra.mxu0 %v1094
      %1160 = vmatprep.subr.bf16.mxu0 %v1097
      %1161 = vmatpush1.bf16.msra.mxu0 %v1096
      %1162 = vmatprep.subr.bf16.mxu0 0
      %1163 = vmatpush1.bf16.msra.mxu0 0
      %1164 = vmatprep.subr.bf16.mxu0 0
      %1165 = vmatpush1.bf16.msra.mxu0 0
      %1166 = vmatprep.subr.bf16.mxu0 0
      %1167 = vmatpush1.bf16.msra.mxu0 0
      %1168 = vmatprep.subr.bf16.mxu0 0
      %1169 = vmatpush1.bf16.msra.mxu0 0
      %1170 = vmatprep.subr.bf16.mxu0 0
      %1171 = vmatpush1.bf16.msra.mxu0 0
      %1172 = vmatprep.subr.bf16.mxu0 0
      %1173 = vmatpush1.bf16.msra.mxu0 0
      %1174 = vmatprep.subr.bf16.mxu0 0
      %1175 = vmatpush1.bf16.msra.mxu0 0
      %1176 = vmatprep.subr.bf16.mxu0 0
      %1177 = vmatpush1.bf16.msra.mxu0 0
      %1178 = vmatprep.mubr.bf16.mxu0 0
      %1179 = vmatmul.mubr.bf16.gmra.mrb[0].mxu0 %v1130
      %v1180 = vpop.f32.mrb[0].mxu0
      %v1181 = vadd.f32 0.0, %v1180
      %v1182 = vpop.f32.mrb[0].mxu0
      %v1183 = vadd.f32 0.0, %v1182
      %v1184 = vpop.f32.mrb[0].mxu0
      %v1185 = vadd.f32 0.0, %v1184
      %v1186 = vpop.f32.mrb[0].mxu0
      %v1187 = vadd.f32 0.0, %v1186
      %1188 = vmatprep.mubr.bf16.mxu0 0
      %1189 = vmatmul.mubr.bf16.gmra.mrb[0].mxu0 %v1131
      %v1190 = vpop.f32.mrb[0].mxu0
      %v1191 = vadd.f32 0.0, %v1190
      %v1192 = vpop.f32.mrb[0].mxu0
      %v1193 = vadd.f32 0.0, %v1192
      %v1194 = vpop.f32.mrb[0].mxu0
      %v1195 = vadd.f32 0.0, %v1194
      %v1196 = vpop.f32.mrb[0].mxu0
      %v1197 = vadd.f32 0.0, %v1196
      %1198 = vmatprep.mubr.bf16.mxu0 0
      %1199 = vmatmul.mubr.bf16.gmra.mrb[0].mxu0 %v1132
      %v1200 = vpop.f32.mrb[0].mxu0
      %v1201 = vadd.f32 0.0, %v1200
      %v1202 = vpop.f32.mrb[0].mxu0
      %v1203 = vadd.f32 0.0, %v1202
      %v1204 = vpop.f32.mrb[0].mxu0
      %v1205 = vadd.f32 0.0, %v1204
      %v1206 = vpop.f32.mrb[0].mxu0
      %v1207 = vadd.f32 0.0, %v1206
      %1208 = vmatprep.mubr.bf16.mxu0 0
      %1209 = vmatmul.mubr.bf16.gmra.mrb[0].mxu0 %v1133
      %v1210 = vpop.f32.mrb[0].mxu0
      %v1211 = vadd.f32 0.0, %v1210
      %v1212 = vpop.f32.mrb[0].mxu0
      %v1213 = vadd.f32 0.0, %v1212
      %v1214 = vpop.f32.mrb[0].mxu0
      %v1215 = vadd.f32 0.0, %v1214
      %v1216 = vpop.f32.mrb[0].mxu0
      %v1217 = vadd.f32 0.0, %v1216
      %1218 = vmatprep.mubr.bf16.mxu0 0
      %1219 = vmatmul.mubr.bf16.gmra.mrb[0].mxu0 %v1134
      %v1220 = vpop.f32.mrb[0].mxu0
      %v1221 = vadd.f32 0.0, %v1220
      %v1222 = vpop.f32.mrb[0].mxu0
      %v1223 = vadd.f32 0.0, %v1222
      %v1224 = vpop.f32.mrb[0].mxu0
      %v1225 = vadd.f32 0.0, %v1224
      %v1226 = vpop.f32.mrb[0].mxu0
      %v1227 = vadd.f32 0.0, %v1226
      %1228 = vmatprep.mubr.bf16.mxu0 0
      %1229 = vmatmul.mubr.bf16.gmra.mrb[0].mxu0 %v1135
      %v1230 = vpop.f32.mrb[0].mxu0
      %v1231 = vadd.f32 0.0, %v1230
      %v1232 = vpop.f32.mrb[0].mxu0
      %v1233 = vadd.f32 0.0, %v1232
      %v1234 = vpop.f32.mrb[0].mxu0
      %v1235 = vadd.f32 0.0, %v1234
      %v1236 = vpop.f32.mrb[0].mxu0
      %v1237 = vadd.f32 0.0, %v1236
      %1238 = vmatprep.mubr.bf16.mxu0 0
      %1239 = vmatmul.mubr.bf16.gmra.mrb[0].mxu0 %v1136
      %v1240 = vpop.f32.mrb[0].mxu0
      %v1241 = vadd.f32 0.0, %v1240
      %v1242 = vpop.f32.mrb[0].mxu0
      %v1243 = vadd.f32 0.0, %v1242
      %v1244 = vpop.f32.mrb[0].mxu0
      %v1245 = vadd.f32 0.0, %v1244
      %v1246 = vpop.f32.mrb[0].mxu0
      %v1247 = vadd.f32 0.0, %v1246
      %1248 = vmatprep.mubr.bf16.mxu0 0
      %1249 = vmatmul.mubr.bf16.gmra.mrb[0].mxu0 %v1137
      %v1250 = vpop.f32.mrb[0].mxu0
      %v1251 = vadd.f32 0.0, %v1250
      %v1252 = vpop.f32.mrb[0].mxu0
      %v1253 = vadd.f32 0.0, %v1252
      %v1254 = vpop.f32.mrb[0].mxu0
      %v1255 = vadd.f32 0.0, %v1254
      %v1256 = vpop.f32.mrb[0].mxu0
      %v1257 = vadd.f32 0.0, %v1256
      %1258 = vdwg.mxu0
      %v1259 = vpack.c.bf16 %v1181, %v1181
      %v1260 = vpack.c.bf16 %v1183, %v1183
      %v1263 = vcombine.low %v1259, %v1260
      %v1265 = vunpack.c.l.s4 1983009808
      %v1266 = vunpack.c.0.s8 %v1265
      %v1267 = vlaneseq
      %v1268 = vshrl.u32 %v1267, 7
      %v1269 = vsub.s32 %v1266, %v1268
      %v1270 = vrot.slane %v1263, %v1269
      %1272 = vst [vmem:[%s303] sm:$0xf] %v1270
      %v1273 = vadd.f32 %v1181, %v1183
      %1274 = vadd.xlane.f32.xlu0 %v1273
      %v1275 = vpop.xlane.xlu0 %1274
      %v1276 = vadd.f32 %v1185, %v1187
      %1277 = vadd.xlane.f32.xlu0 %v1276
      %v1278 = vpop.xlane.xlu0 %1277
      %v1279 = vadd.f32 %v1191, %v1193
      %1280 = vadd.xlane.f32.xlu0 %v1279
      %v1281 = vpop.xlane.xlu0 %1280
      %v1282 = vadd.f32 %v1195, %v1197
      %1283 = vadd.xlane.f32.xlu0 %v1282
      %v1284 = vpop.xlane.xlu0 %1283
      %v1285 = vadd.f32 %v1201, %v1203
      %1286 = vadd.xlane.f32.xlu0 %v1285
      %v1287 = vpop.xlane.xlu0 %1286
      %v1288 = vadd.f32 %v1205, %v1207
      %1289 = vadd.xlane.f32.xlu0 %v1288
      %v1290 = vpop.xlane.xlu0 %1289
      %v1291 = vadd.f32 %v1211, %v1213
      %1292 = vadd.xlane.f32.xlu0 %v1291
      %v1293 = vpop.xlane.xlu0 %1292
      %v1294 = vadd.f32 %v1215, %v1217
      %1295 = vadd.xlane.f32.xlu0 %v1294
      %v1296 = vpop.xlane.xlu0 %1295
      %v1297 = vadd.f32 %v1221, %v1223
      %1298 = vadd.xlane.f32.xlu0 %v1297
      %v1299 = vpop.xlane.xlu0 %1298
      %v1300 = vadd.f32 %v1225, %v1227
      %1301 = vadd.xlane.f32.xlu0 %v1300
      %v1302 = vpop.xlane.xlu0 %1301
      %v1303 = vadd.f32 %v1231, %v1233
      %1304 = vadd.xlane.f32.xlu0 %v1303
      %v1305 = vpop.xlane.xlu0 %1304
      %v1306 = vadd.f32 %v1235, %v1237
      %1307 = vadd.xlane.f32.xlu0 %v1306
      %v1308 = vpop.xlane.xlu0 %1307
      %v1309 = vadd.f32 %v1241, %v1243
      %1310 = vadd.xlane.f32.xlu0 %v1309
      %v1311 = vpop.xlane.xlu0 %1310
      %v1312 = vadd.f32 %v1245, %v1247
      %1313 = vadd.xlane.f32.xlu0 %v1312
      %v1314 = vpop.xlane.xlu0 %1313
      %v1315 = vadd.f32 %v1251, %v1253
      %1316 = vadd.xlane.f32.xlu0 %v1315
      %v1317 = vpop.xlane.xlu0 %1316
      %v1318 = vadd.f32 %v1255, %v1257
      %1319 = vadd.xlane.f32.xlu0 %v1318
      %v1320 = vpop.xlane.xlu0 %1319
      %vm1321 = vcmask 7168
      %1322 = vst.msk [vmem:[%s313] sm:$0xff] %vm1321, %v1275
      %1323 = vst.msk [vmem:[%s313 + $0x8] sm:$0xff] %vm1321, %v1278
      %1324 = vst.msk [vmem:[%s313 + $0x10] sm:$0xff] %vm1321, %v1281
      %1325 = vst.msk [vmem:[%s313 + $0x18] sm:$0xff] %vm1321, %v1284
      %1326 = vst.msk [vmem:[%s313 + $0x20] sm:$0xff] %vm1321, %v1287
      %1327 = vst.msk [vmem:[%s313 + $0x28] sm:$0xff] %vm1321, %v1290
      %1328 = vst.msk [vmem:[%s313 + $0x30] sm:$0xff] %vm1321, %v1293
      %1329 = vst.msk [vmem:[%s313 + $0x38] sm:$0xff] %vm1321, %v1296
      %1330 = vst.msk [vmem:[%s313 + $0x40] sm:$0xff] %vm1321, %v1299
      %1331 = vst.msk [vmem:[%s313 + $0x48] sm:$0xff] %vm1321, %v1302
      %1332 = vst.msk [vmem:[%s313 + $0x50] sm:$0xff] %vm1321, %v1305
      %1333 = vst.msk [vmem:[%s313 + $0x58] sm:$0xff] %vm1321, %v1308
      %1334 = vst.msk [vmem:[%s313 + $0x60] sm:$0xff] %vm1321, %v1311
      %1335 = vst.msk [vmem:[%s313 + $0x68] sm:$0xff] %vm1321, %v1314
      %1336 = vst.msk [vmem:[%s313 + $0x70] sm:$0xff] %vm1321, %v1317
      %1337 = vst.msk [vmem:[%s313 + $0x78] sm:$0xff] %vm1321, %v1320
      %v1338 = vmul.f32 %v1181, %v1181
      %v1339 = vmul.f32 %v1183, %v1183
      %v1340 = vmul.f32 %v1185, %v1185
      %v1341 = vmul.f32 %v1187, %v1187
      %v1342 = vmul.f32 %v1191, %v1191
      %v1343 = vmul.f32 %v1193, %v1193
      %v1344 = vmul.f32 %v1195, %v1195
      %v1345 = vmul.f32 %v1197, %v1197
      %v1346 = vmul.f32 %v1201, %v1201
      %v1347 = vmul.f32 %v1203, %v1203
      %v1348 = vmul.f32 %v1205, %v1205
      %v1349 = vmul.f32 %v1207, %v1207
      %v1350 = vmul.f32 %v1211, %v1211
      %v1351 = vmul.f32 %v1213, %v1213
      %v1352 = vmul.f32 %v1215, %v1215
      %v1353 = vmul.f32 %v1217, %v1217
      %v1354 = vmul.f32 %v1221, %v1221
      %v1355 = vmul.f32 %v1223, %v1223
      %v1356 = vmul.f32 %v1225, %v1225
      %v1357 = vmul.f32 %v1227, %v1227
      %v1358 = vmul.f32 %v1231, %v1231
      %v1359 = vmul.f32 %v1233, %v1233
      %v1360 = vmul.f32 %v1235, %v1235
      %v1361 = vmul.f32 %v1237, %v1237
      %v1362 = vmul.f32 %v1241, %v1241
      %v1363 = vmul.f32 %v1243, %v1243
      %v1364 = vmul.f32 %v1245, %v1245
      %v1365 = vmul.f32 %v1247, %v1247
      %v1366 = vmul.f32 %v1251, %v1251
      %v1367 = vmul.f32 %v1253, %v1253
      %v1368 = vmul.f32 %v1255, %v1255
      %v1369 = vmul.f32 %v1257, %v1257
      %v1370 = vadd.f32 %v1338, %v1339
      %1371 = vadd.xlane.f32.xlu0 %v1370
      %v1372 = vpop.xlane.xlu0 %1371
      %v1373 = vadd.f32 %v1340, %v1341
      %1374 = vadd.xlane.f32.xlu0 %v1373
      %v1375 = vpop.xlane.xlu0 %1374
      %v1376 = vadd.f32 %v1342, %v1343
      %1377 = vadd.xlane.f32.xlu0 %v1376
      %v1378 = vpop.xlane.xlu0 %1377
      %v1379 = vadd.f32 %v1344, %v1345
      %1380 = vadd.xlane.f32.xlu0 %v1379
      %v1381 = vpop.xlane.xlu0 %1380
      %v1382 = vadd.f32 %v1346, %v1347
      %1383 = vadd.xlane.f32.xlu0 %v1382
      %v1384 = vpop.xlane.xlu0 %1383
      %v1385 = vadd.f32 %v1348, %v1349
      %1386 = vadd.xlane.f32.xlu0 %v1385
      %v1387 = vpop.xlane.xlu0 %1386
      %v1388 = vadd.f32 %v1350, %v1351
      %1389 = vadd.xlane.f32.xlu0 %v1388
      %v1390 = vpop.xlane.xlu0 %1389
      %v1391 = vadd.f32 %v1352, %v1353
      %1392 = vadd.xlane.f32.xlu0 %v1391
      %v1393 = vpop.xlane.xlu0 %1392
      %v1394 = vadd.f32 %v1354, %v1355
      %1395 = vadd.xlane.f32.xlu0 %v1394
      %v1396 = vpop.xlane.xlu0 %1395
      %v1397 = vadd.f32 %v1356, %v1357
      %1398 = vadd.xlane.f32.xlu0 %v1397
      %v1399 = vpop.xlane.xlu0 %1398
      %v1400 = vadd.f32 %v1358, %v1359
      %1401 = vadd.xlane.f32.xlu0 %v1400
      %v1402 = vpop.xlane.xlu0 %1401
      %v1403 = vadd.f32 %v1360, %v1361
      %1404 = vadd.xlane.f32.xlu0 %v1403
      %v1405 = vpop.xlane.xlu0 %1404
      %v1406 = vadd.f32 %v1362, %v1363
      %1407 = vadd.xlane.f32.xlu0 %v1406
      %v1408 = vpop.xlane.xlu0 %1407
      %v1409 = vadd.f32 %v1364, %v1365
      %1410 = vadd.xlane.f32.xlu0 %v1409
      %v1411 = vpop.xlane.xlu0 %1410
      %v1412 = vadd.f32 %v1366, %v1367
      %1413 = vadd.xlane.f32.xlu0 %v1412
      %v1414 = vpop.xlane.xlu0 %1413
      %v1415 = vadd.f32 %v1368, %v1369
      %1416 = vadd.xlane.f32.xlu0 %v1415
      %v1417 = vpop.xlane.xlu0 %1416
      %vm1418 = vcmask 15368
      %1419 = vst.msk [vmem:[%s313] sm:$0xff] %vm1418, %v1372
      %1420 = vst.msk [vmem:[%s313 + $0x8] sm:$0xff] %vm1418, %v1375
      %1421 = vst.msk [vmem:[%s313 + $0x10] sm:$0xff] %vm1418, %v1378
      %1422 = vst.msk [vmem:[%s313 + $0x18] sm:$0xff] %vm1418, %v1381
      %1423 = vst.msk [vmem:[%s313 + $0x20] sm:$0xff] %vm1418, %v1384
      %1424 = vst.msk [vmem:[%s313 + $0x28] sm:$0xff] %vm1418, %v1387
      %1425 = vst.msk [vmem:[%s313 + $0x30] sm:$0xff] %vm1418, %v1390
      %1426 = vst.msk [vmem:[%s313 + $0x38] sm:$0xff] %vm1418, %v1393
      %1427 = vst.msk [vmem:[%s313 + $0x40] sm:$0xff] %vm1418, %v1396
      %1428 = vst.msk [vmem:[%s313 + $0x48] sm:$0xff] %vm1418, %v1399
      %1429 = vst.msk [vmem:[%s313 + $0x50] sm:$0xff] %vm1418, %v1402
      %1430 = vst.msk [vmem:[%s313 + $0x58] sm:$0xff] %vm1418, %v1405
      %1431 = vst.msk [vmem:[%s313 + $0x60] sm:$0xff] %vm1418, %v1408
      %1432 = vst.msk [vmem:[%s313 + $0x68] sm:$0xff] %vm1418, %v1411
      %1433 = vst.msk [vmem:[%s313 + $0x70] sm:$0xff] %vm1418, %v1414
      %1434 = vst.msk [vmem:[%s313 + $0x78] sm:$0xff] %vm1418, %v1417
      %s1435 = smul.u32 2, %s23
      %p1436 = scmp.lt.s32.totalorder %s22, 1
      %s1437 = scalar_select %p1436, %s22, 1
      %p1438 = scmp.lt.s32.totalorder %s1435, 1
      %s1439 = scalar_select %p1438, %s1435, 1
      %s1440 = smul.addr %s1437, 2
      %s1441 = sadd.s32 %s1439, %s1440
      %s1442 = smul.addr %s1441, 2
      %s1443 = scalar_lea.vmem %s5, %s1442
      %p1444 = scmp.lt.s32.totalorder %s22, 1
      %s1445 = scalar_select %p1444, %s22, 1
      %p1446 = scmp.lt.s32.totalorder %s23, 0
      %s1447 = scalar_select %p1446, %s23, 0
      %s1448 = smul.addr %s1447, 16
      %s1449 = smul.addr %s1445, 16
      %s1450 = sadd.s32 %s1448, %s1449
      %s1451 = smul.addr %s1450, 8
      %s1452 = scalar_lea.vmem %s6, %s1451
      // Predicated region
      $region41: #{mlp_forward.4} parent=39 // pred_check
        %p1453 = pneg %p162
      $region42: #{mlp_forward.4} parent=39 // pred_check_branch
        %1455 = sbr.rel (%p1453) target = $region44
      $region43: #{mlp_forward.4} parent=39 // pred_region
        %s1456 = smul.u32 2, %s23
      $region44: #{mlp_forward.4} parent=39 // pred_fallthru
        _
      // Predicated region
      $region45: #{mlp_forward.4} parent=39 // pred_check
        %p1457 = pneg %p190
      $region46: #{mlp_forward.4} parent=39 // pred_check_branch
        %1459 = sbr.rel (%p1457) target = $region48
      $region47: #{mlp_forward.4} parent=39 // pred_region
        _
      $region48: #{mlp_forward.4} parent=39 // pred_fallthru
        _
    $region40: #{mlp_forward.4} parent=5 // pred_fallthru
      _
    %p1460 = scmp.le.s32.totalorder 2, %s13
    // Predicated region
    $region49: #{mlp_forward.4} parent=5 // pred_check
      %p1461 = pneg %p1460
    $region50: #{mlp_forward.4} parent=5 // pred_check_branch
      %1463 = sbr.rel (%p1461) target = $region52
    $region51: #{mlp_forward.4} parent=5 // pred_region
      %s1464 = ssub.s32 %s13, 2
      // Predicated region
      $region53: #{mlp_forward.4} parent=51 // pred_check
        %p1465 = pneg %p168
      $region54: #{mlp_forward.4} parent=51 // pred_check_branch
        %1467 = sbr.rel (%p1465) target = $region56
      $region55: #{mlp_forward.4} parent=51 // pred_region
        %s1468 = smul.u32 2, %s25
        %p1469 = scmp.lt.s32.totalorder %s24, 1
        %s1470 = scalar_select %p1469, %s24, 1
        %p1471 = scmp.lt.s32.totalorder %s1468, 1
        %s1472 = scalar_select %p1471, %s1468, 1
        %s1473 = smul.addr %s1470, 2
        %s1474 = sadd.s32 %s1472, %s1473
        %s1475 = smul.addr %s1474, 2
        %s1476 = scalar_lea.vmem %s5, %s1475
      $region56: #{mlp_forward.4} parent=51 // pred_fallthru
        _
      // Predicated region
      $region57: #{mlp_forward.4} parent=51 // pred_check
        %p1477 = pneg %p196
      $region58: #{mlp_forward.4} parent=51 // pred_check_branch
        %1479 = sbr.rel (%p1477) target = $region60
      $region59: #{mlp_forward.4} parent=51 // pred_region
        %p1480 = scmp.lt.s32.totalorder %s24, 1
        %s1481 = scalar_select %p1480, %s24, 1
        %p1482 = scmp.lt.s32.totalorder %s25, 0
        %s1483 = scalar_select %p1482, %s25, 0
        %s1484 = smul.addr %s1483, 16
        %s1485 = smul.addr %s1481, 16
        %s1486 = sadd.s32 %s1484, %s1485
        %s1487 = smul.addr %s1486, 8
        %s1488 = scalar_lea.vmem %s6, %s1487
      $region60: #{mlp_forward.4} parent=51 // pred_fallthru
        _
    $region52: #{mlp_forward.4} parent=5 // pred_fallthru
      _
  $region6: #{mlp_forward.4} parent=0 // loop_footer
    %s17 = sadd.s32 1, %s13
  $region7: #{mlp_forward.4} parent=0 // loop_footer_branch
    %12 = sbr.rel target = $region3
  $region8: #{mlp_forward.4} parent=0 // loop_exit
    _

</llo_original>
